<compile_context>
chip_gen: v5e
topology: v5e:2x2
jax: 0.10.0
libtpu: 0.0.40
codegen_flags: <defaults>
</compile_context>

<pallas_src>
import functools

import jax
import jax.numpy as jnp
from jax import lax
from jax.experimental import pallas as pl
from jax.experimental.pallas import tpu as pltpu


# -----------------------------------------------------------------------------
# Pallas kernel: whole bottleneck for a block of NB images.
# -----------------------------------------------------------------------------
def _bottleneck_kernel(xcol_ref, base_ref, mask_ref,
                       w1_ref, b1_ref,        # conv1 (2x2 s2) + folded BN
                       w2_ref, b2_ref,        # conv2 (3x3 p1, taps fused) + BN
                       w3_ref, b3_ref,        # conv3 (1x1)   + folded BN
                       out_ref, idx_ref,
                       stk_ref,               # VMEM scratch (9*C_int, L)
                       *, Ho, Wo, NB):
    P = Ho * Wo
    L = NB * P
    W_in = 2 * Wo                              # input width (for flat indices)
    C_in = idx_ref.shape[1]
    C_int = w1_ref.shape[0]
    C_out = out_ref.shape[1]
    cdt = xcol_ref.dtype                       # MXU operand dtype (f32 / bf16)

    xcol = xcol_ref[...]                       # (4*C_in, L)

    # ---- main branch: MaxPool2d(2, stride=2) value + flat argmax index ------
    best = xcol[0:C_in, :]
    off = jnp.zeros((C_in, L), jnp.int32)
    for k in range(1, 4):
        kh, kw = k // 2, k % 2
        cand = xcol[k * C_in:(k + 1) * C_in, :]
        take = cand > best                     # first max wins on ties
        best = jnp.where(take, cand, best)
        off = jnp.where(take, jnp.int32(kh * W_in + kw), off)
    idx_full = base_ref[...] + off             # PyTorch flat index = h*W + w
    best32 = best.astype(jnp.float32)          # residual path stays f32

    # ---- ext branch ----------------------------------------------------------
    # conv1: 2x2 stride-2 conv == one matmul over the im2col rows (BN folded).
    ext1 = jnp.dot(w1_ref[...], xcol, preferred_element_type=jnp.float32)
    ext1 = jnp.maximum(ext1 + b1_ref[...], 0.0)               # (C_int, L) f32

    # conv2: 3x3 / pad 1.  The nine neighbour maps (XLU lane-rolls + border
    # masks) are stacked into ONE (9*C_int, L) RHS so the contraction is a
    # single MXU matmul with K = 9*C_int instead of nine K = C_int pushes.
    t = 0
    for dh in (-1, 0, 1):
        for dw in (-1, 0, 1):
            shift = (-(dh * Wo + dw)) % L
            rolled = pltpu.roll(ext1, shift=shift, axis=1) if shift else ext1
            # Mask BEFORE the matmul: zeroes out-of-image pixels and any lanes
            # the circular roll dragged across image boundaries.
            stk_ref[t * C_int:(t + 1) * C_int, :] = \
                (rolled * mask_ref[t:t + 1, :]).astype(cdt)
            t += 1
    ext2 = jnp.dot(w2_ref[...], stk_ref[...],
                   preferred_element_type=jnp.float32)
    ext2 = jnp.maximum(ext2 + b2_ref[...], 0.0)               # (C_int, L) f32

    # conv3: 1x1 conv + folded BN + ReLU.   Dropout2d(p=0) is the identity.
    ext3 = jnp.dot(w3_ref[...], ext2.astype(cdt),
                   preferred_element_type=jnp.float32)
    ext3 = jnp.maximum(ext3 + b3_ref[...], 0.0)               # (C_out, L) f32

    # ---- residual: zero-pad main to C_out channels, add, output ReLU --------
    # Stores are per image (leading block dim) so the NCHW reshape is free.
    for nb in range(NB):
        lo, hi = nb * P, (nb + 1) * P
        e = ext3[:, lo:hi]
        m = best32[:, lo:hi]
        out_ref[nb, 0:C_in, :] = jnp.maximum(e[0:C_in, :] + m, 0.0)
        if C_out > C_in:
            out_ref[nb, C_in:C_out, :] = jnp.maximum(e[C_in:C_out, :], 0.0)
        idx_ref[nb, :, :] = idx_full[:, lo:hi]


# -----------------------------------------------------------------------------
# Wrapper
# -----------------------------------------------------------------------------
@functools.partial(jax.jit, static_argnames=("use_bf16", "nb"))
def downsampling_bottleneck(x, folded_params, *, use_bf16=False, nb=2):
    N, C_in, H, W = x.shape
    assert H % 2 == 0 and W % 2 == 0
    Ho, Wo = H // 2, W // 2
    P = Ho * Wo
    NB = nb if (N % nb == 0) else 1            # images per grid step
    G = N // NB                                # grid length (keep it even)
    L = NB * P                                 # lane width of every matmul

    w1m, b1m, w2m, b2m, w3m, b3m = folded_params
    C_int = w1m.shape[0]
    C_out = w3m.shape[0]
    assert C_out >= C_in

    cdt = jnp.bfloat16 if use_bf16 else jnp.float32

    # im2col of the 2x2/stride-2 structure (also feeds the MaxPool):
    # rows = (kh*2 + kw)*C_in + c, lanes = nb*P + ho*Wo + wo (lane-dense).
    xcol = x.reshape(G, NB, C_in, Ho, 2, Wo, 2)
    xcol = jnp.transpose(xcol, (0, 4, 6, 2, 1, 3, 5)).reshape(G, 4 * C_in, L)
    xcol = xcol.astype(cdt)

    # Per-pixel constants (same for every image): top-left flat index of each
    # 2x2 input block, and the 9 border masks of the 3x3 conv, tiled to L.
    p = jnp.arange(P, dtype=jnp.int32)
    ho, wo = p // Wo, p % Wo
    base = jnp.tile(((2 * ho) * W + 2 * wo).reshape(1, P), (1, NB))
    taps = [(dh, dw) for dh in (-1, 0, 1) for dw in (-1, 0, 1)]
    mask9 = jnp.stack(
        [(((ho + dh) >= 0) & ((ho + dh) < Ho) &
          ((wo + dw) >= 0) & ((wo + dw) < Wo)).astype(jnp.float32)
         for dh, dw in taps], axis=0)                          # (9, P)
    mask9 = jnp.tile(mask9, (1, NB))                           # (9, L)

    w1c, w2c, w3c = (w.astype(cdt) for w in (w1m, w2m, w3m))

    kernel = functools.partial(_bottleneck_kernel, Ho=Ho, Wo=Wo, NB=NB)
    full = lambda shape: pl.BlockSpec(shape, lambda g: tuple(0 for _ in shape))

    npix = N * P
    flops = 2 * npix * (C_int * 4 * C_in + C_int * 9 * C_int + C_out * C_int)
    bytes_accessed = (xcol.size * xcol.dtype.itemsize
                      + npix * C_out * 4 + npix * C_in * 4)
    cost = pl.CostEstimate(flops=flops, bytes_accessed=bytes_accessed,
                           transcendentals=0)

    out, idx = pl.pallas_call(
        kernel,
        out_shape=(jax.ShapeDtypeStruct((G, NB, C_out, P), jnp.float32),
                   jax.ShapeDtypeStruct((G, NB, C_in, P), jnp.int32)),
        grid=(G,),
        in_specs=[
            pl.BlockSpec((None, 4 * C_in, L), lambda g: (g, 0, 0)),  # xcol
            full((1, L)),                                            # base
            full((9, L)),                                            # masks
            full((C_int, 4 * C_in)), full((C_int, 1)),               # conv1
            full((C_int, 9 * C_int)), full((C_int, 1)),              # conv2
            full((C_out, C_int)), full((C_out, 1)),                  # conv3
        ],
        out_specs=(pl.BlockSpec((None, NB, C_out, P), lambda g: (g, 0, 0, 0)),
                   pl.BlockSpec((None, NB, C_in, P), lambda g: (g, 0, 0, 0))),
        scratch_shapes=[pltpu.VMEM((9 * C_int, L), cdt)],
        compiler_params=pltpu.CompilerParams(
            dimension_semantics=("parallel",)),
        cost_estimate=cost,
    )(xcol, base, mask9, w1c, b1m, w2c, b2m, w3c, b3m)

    # Pure reshapes (no transposes): blocks are already NCHW row-major.
    return out.reshape(N, C_out, Ho, Wo), idx.reshape(N, C_in, Ho, Wo)


# -----------------------------------------------------------------------------
# Parameter construction (PyTorch layouts) + folding of inference-mode BN.
# -----------------------------------------------------------------------------
def make_raw_params(key, C_in, C_out, internal_ratio=4):
    assert 1 < internal_ratio <= C_in
    C_int = C_in // internal_ratio
    ks = jax.random.split(key, 6)
    nrm = lambda k, s: 0.1 * jax.random.normal(k, s, jnp.float32)

    def bn(k, C):
        k1, k2, k3, k4 = jax.random.split(k, 4)
        gamma = 1.0 + 0.1 * jax.random.normal(k1, (C,), jnp.float32)
        beta = 0.1 * jax.random.normal(k2, (C,), jnp.float32)
        mean = 0.1 * jax.random.normal(k3, (C,), jnp.float32)
        var = 1.0 + 0.1 * jnp.abs(jax.random.normal(k4, (C,), jnp.float32))
        return gamma, beta, mean, var

    W1 = nrm(ks[0], (C_int, C_in, 2, 2))     # ext_conv1 (OIHW), bias=False
    W2 = nrm(ks[1], (C_int, C_int, 3, 3))    # ext_conv2
    W3 = nrm(ks[2], (C_out, C_int, 1, 1))    # ext_conv3
    return (W1, bn(ks[3], C_int), W2, bn(ks[4], C_int), W3, bn(ks[5], C_out))


def fold_params(raw, eps=1e-5):
    W1, bn1, W2, bn2, W3, bn3 = raw

    def fold(b):
        g, be, m, v = b
        s = g / jnp.sqrt(v + eps)
        return s, be - m * s

    s1, sh1 = fold(bn1)
    s2, sh2 = fold(bn2)
    s3, sh3 = fold(bn3)
    C_int, C_in = W1.shape[0], W1.shape[1]
    C_out = W3.shape[0]
    # conv1: rows ordered (kh*2+kw)*C_in + ci to match the im2col view.
    w1m = jnp.transpose(W1, (0, 2, 3, 1)).reshape(C_int, 4 * C_in) * s1[:, None]
    # conv2: flat (C_int, 9*C_int), columns ordered tap-major then channel,
    # tap order (dh, dw) row-major -- matches the in-kernel stacking order.
    w2m = jnp.transpose(W2, (0, 2, 3, 1)).reshape(C_int, 9 * C_int) * s2[:, None]
    w3m = W3.reshape(C_out, C_int) * s3[:, None]
    return (w1m, sh1.reshape(C_int, 1), w2m, sh2.reshape(C_int, 1),
            w3m, sh3.reshape(C_out, 1))


# -----------------------------------------------------------------------------
# Pure-JAX/XLA reference (independent formulation, NCHW) for correctness check
# -----------------------------------------------------------------------------
def reference(x, raw, eps=1e-5):
    W1, bn1, W2, bn2, W3, bn3 = raw
    N, C_in, H, W = x.shape
    C_out = W3.shape[0]
    Ho, Wo = H // 2, W // 2

    def bn(t, p):
        g, b, m, v = p
        s = g / jnp.sqrt(v + eps)
        return t * s[None, :, None, None] + (b - m * s)[None, :, None, None]

    dn = ('NCHW', 'OIHW', 'NCHW')
    ext = lax.conv_general_dilated(x, W1, (2, 2), 'VALID', dimension_numbers=dn)
    ext = jax.nn.relu(bn(ext, bn1))
    ext = lax.conv_general_dilated(ext, W2, (1, 1), ((1, 1), (1, 1)),
                                   dimension_numbers=dn)
    ext = jax.nn.relu(bn(ext, bn2))
    ext = lax.conv_general_dilated(ext, W3, (1, 1), 'VALID', dimension_numbers=dn)
    ext = jax.nn.relu(bn(ext, bn3))            # Dropout2d(p=0) == identity

    xb = (x.reshape(N, C_in, Ho, 2, Wo, 2)
           .transpose(0, 1, 2, 4, 3, 5).reshape(N, C_in, Ho, Wo, 4))
    main = xb.max(-1)
    arg = jnp.argmax(xb, -1)
    kh, kw = arg // 2, arg % 2
    ho = jnp.arange(Ho).reshape(1, 1, Ho, 1)
    wo = jnp.arange(Wo).reshape(1, 1, 1, Wo)
    idx = (2 * ho + kh) * W + (2 * wo + kw)

    pad = jnp.zeros((N, C_out - C_in, Ho, Wo), x.dtype)
    out = jax.nn.relu(jnp.concatenate([main, pad], axis=1) + ext)
    return out, idx.astype(jnp.int32)


# -----------------------------------------------------------------------------
if __name__ == "__main__":
    N, C_in, H, W = 4, 16, 32, 32
    internal_ratio = 4
    C_out = 32

    key = jax.random.PRNGKey(0)
    k_x, k_p = jax.random.split(key)
    x = jax.random.normal(k_x, (N, C_in, H, W), jnp.float32)

    raw = make_raw_params(k_p, C_in, C_out, internal_ratio)
    folded = fold_params(raw)

    # f32 path (exact vs. reference).
    out, idx = downsampling_bottleneck(x, folded, use_bf16=False, nb=2)
    out = jax.block_until_ready(out)
    idx = jax.block_until_ready(idx)

    ref_out, ref_idx = reference(x, raw)
    ref_out = jax.block_until_ready(ref_out)

    assert out.shape == (N, C_out, H // 2, W // 2), out.shape
    assert idx.shape == (N, C_in, H // 2, W // 2), idx.shape
    assert jnp.allclose(out, ref_out, rtol=1e-4, atol=1e-4), \
        float(jnp.max(jnp.abs(out - ref_out)))
    assert jnp.array_equal(idx, ref_idx), "max_indices mismatch"

    # bf16-MXU-operand path (v6e/v7x): looser value tolerance; pool indices may
    # legitimately differ where bf16 rounding creates exact ties, so they are
    # only checked for shape/dtype here.
    out_b, idx_b = downsampling_bottleneck(x, folded, use_bf16=True, nb=2)
    out_b = jax.block_until_ready(out_b)
    idx_b = jax.block_until_ready(idx_b)
    assert out_b.shape == out.shape and idx_b.shape == idx.shape
    assert jnp.allclose(out_b, ref_out, rtol=1e-1, atol=1e-1), \
        float(jnp.max(jnp.abs(out_b - ref_out)))

    print("KERNEL_OK")
</pallas_src>

<mosaic_0001>
module attributes {stable_mosaic.version = 11 : i64} {
  func.func @_bottleneck_kernel(%arg0: i32, %arg1: memref<1x64x512xf32, #tpu.memory_space<vmem>>, %arg2: memref<1x512xi32, #tpu.memory_space<vmem>>, %arg3: memref<9x512xf32, #tpu.memory_space<vmem>>, %arg4: memref<4x64xf32, #tpu.memory_space<vmem>>, %arg5: memref<4x1xf32, #tpu.memory_space<vmem>>, %arg6: memref<4x36xf32, #tpu.memory_space<vmem>>, %arg7: memref<4x1xf32, #tpu.memory_space<vmem>>, %arg8: memref<32x4xf32, #tpu.memory_space<vmem>>, %arg9: memref<32x1xf32, #tpu.memory_space<vmem>>, %arg10: memref<1x2x32x256xf32, #tpu.memory_space<vmem>>, %arg11: memref<1x2x16x256xi32, #tpu.memory_space<vmem>>, %arg12: memref<36x512xf32, #tpu.memory_space<vmem>>) attributes {dimension_semantics = [#tpu.dimension_semantics<parallel>], iteration_bounds = array<i64: 2>, scalar_prefetch = 0 : i64, scratch_operands = 1 : i64, tpu.core_type = #tpu.core_type<tc>, window_params = [{transform_indices = @transform_0, window_bounds = array<i64: 1, 64, 512>}, {pipeline_mode = #tpu.pipeline_mode<synchronous>, transform_indices = @transform_1, window_bounds = array<i64: 1, 512>}, {pipeline_mode = #tpu.pipeline_mode<synchronous>, transform_indices = @transform_2, window_bounds = array<i64: 9, 512>}, {pipeline_mode = #tpu.pipeline_mode<synchronous>, transform_indices = @transform_3, window_bounds = array<i64: 4, 64>}, {pipeline_mode = #tpu.pipeline_mode<synchronous>, transform_indices = @transform_4, window_bounds = array<i64: 4, 1>}, {pipeline_mode = #tpu.pipeline_mode<synchronous>, transform_indices = @transform_5, window_bounds = array<i64: 4, 36>}, {pipeline_mode = #tpu.pipeline_mode<synchronous>, transform_indices = @transform_6, window_bounds = array<i64: 4, 1>}, {pipeline_mode = #tpu.pipeline_mode<synchronous>, transform_indices = @transform_7, window_bounds = array<i64: 32, 4>}, {pipeline_mode = #tpu.pipeline_mode<synchronous>, transform_indices = @transform_8, window_bounds = array<i64: 32, 1>}, {transform_indices = @transform_9, window_bounds = array<i64: 1, 2, 32, 256>}, {transform_indices = @transform_10, window_bounds = array<i64: 1, 2, 16, 256>}]} {
    %c0 = arith.constant 0 : index
    %c0_0 = arith.constant 0 : index
    %c0_1 = arith.constant 0 : index
    %0 = vector.load %arg1[%c0, %c0_0, %c0_1] : memref<1x64x512xf32, #tpu.memory_space<vmem>>, vector<1x64x512xf32>
    %1 = vector.shape_cast %0 : vector<1x64x512xf32> to vector<64x512xf32>
    %2 = vector.extract_strided_slice %1 {offsets = [0, 0], sizes = [16, 512], strides = [1, 1]} : vector<64x512xf32> to vector<16x512xf32>
    %c0_i32 = arith.constant 0 : i32
    %3 = vector.broadcast %c0_i32 : i32 to vector<16x512xi32>
    %4 = vector.extract_strided_slice %1 {offsets = [16, 0], sizes = [16, 512], strides = [1, 1]} : vector<64x512xf32> to vector<16x512xf32>
    %5 = arith.cmpf ogt, %4, %2 : vector<16x512xf32>
    %6 = arith.select %5, %4, %2 : vector<16x512xi1>, vector<16x512xf32>
    %c1_i32 = arith.constant 1 : i32
    %7 = vector.broadcast %c1_i32 : i32 to vector<16x512xi32>
    %8 = arith.select %5, %7, %3 : vector<16x512xi1>, vector<16x512xi32>
    %9 = vector.extract_strided_slice %1 {offsets = [32, 0], sizes = [16, 512], strides = [1, 1]} : vector<64x512xf32> to vector<16x512xf32>
    %10 = arith.cmpf ogt, %9, %6 : vector<16x512xf32>
    %11 = arith.select %10, %9, %6 : vector<16x512xi1>, vector<16x512xf32>
    %c32_i32 = arith.constant 32 : i32
    %12 = vector.broadcast %c32_i32 : i32 to vector<16x512xi32>
    %13 = arith.select %10, %12, %8 : vector<16x512xi1>, vector<16x512xi32>
    %14 = vector.extract_strided_slice %1 {offsets = [48, 0], sizes = [16, 512], strides = [1, 1]} : vector<64x512xf32> to vector<16x512xf32>
    %15 = arith.cmpf ogt, %14, %11 : vector<16x512xf32>
    %16 = arith.select %15, %14, %11 : vector<16x512xi1>, vector<16x512xf32>
    %c33_i32 = arith.constant 33 : i32
    %17 = vector.broadcast %c33_i32 : i32 to vector<16x512xi32>
    %18 = arith.select %15, %17, %13 : vector<16x512xi1>, vector<16x512xi32>
    %c0_2 = arith.constant 0 : index
    %c0_3 = arith.constant 0 : index
    %19 = vector.load %arg2[%c0_2, %c0_3] : memref<1x512xi32, #tpu.memory_space<vmem>>, vector<1x512xi32>
    %20 = vector.broadcast %19 : vector<1x512xi32> to vector<16x512xi32>
    %21 = arith.addi %20, %18 : vector<16x512xi32>
    %c0_4 = arith.constant 0 : index
    %c0_5 = arith.constant 0 : index
    %22 = vector.load %arg4[%c0_4, %c0_5] : memref<4x64xf32, #tpu.memory_space<vmem>>, vector<4x64xf32>
    %cst = arith.constant dense<0.000000e+00> : vector<4x512xf32>
    %23 = tpu.matmul %22, %1, %cst {dimension_numbers = #tpu.dot_dimension_numbers<[1], [0], [0], [1], [0, 0, 1, 1], [], []>} : vector<4x64xf32>, vector<64x512xf32>, vector<4x512xf32> -> vector<4x512xf32>
    %c0_6 = arith.constant 0 : index
    %c0_7 = arith.constant 0 : index
    %24 = vector.load %arg5[%c0_6, %c0_7] : memref<4x1xf32, #tpu.memory_space<vmem>>, vector<4x1xf32>
    %25 = vector.broadcast %24 : vector<4x1xf32> to vector<4x512xf32>
    %26 = arith.addf %23, %25 : vector<4x512xf32>
    %cst_8 = arith.constant 0.000000e+00 : f32
    %27 = vector.broadcast %cst_8 : f32 to vector<4x512xf32>
    %28 = arith.maximumf %26, %27 : vector<4x512xf32>
    %c17_i32 = arith.constant 17 : i32
    %29 = tpu.dynamic_rotate %28 by %c17_i32 dim 1 : vector<4x512xf32>, i32 -> vector<4x512xf32>
    %c0_9 = arith.constant 0 : index
    %c0_10 = arith.constant 0 : index
    %30 = vector.load %arg3[%c0_9, %c0_10] : memref<9x512xf32, #tpu.memory_space<vmem>>, vector<1x512xf32>
    %31 = vector.broadcast %30 : vector<1x512xf32> to vector<4x512xf32>
    %32 = arith.mulf %29, %31 : vector<4x512xf32>
    %c0_11 = arith.constant 0 : index
    %c0_12 = arith.constant 0 : index
    %33 = vector.load %arg12[%c0_11, %c0_12] : memref<36x512xf32, #tpu.memory_space<vmem>>, vector<4x512xf32>
    tpu.vector_store %arg12[%c0_11, %c0_12], %32 {strides = array<i32>} : memref<36x512xf32, #tpu.memory_space<vmem>>, vector<4x512xf32>,
    %c16_i32 = arith.constant 16 : i32
    %34 = tpu.dynamic_rotate %28 by %c16_i32 dim 1 : vector<4x512xf32>, i32 -> vector<4x512xf32>
    %c1 = arith.constant 1 : index
    %c0_13 = arith.constant 0 : index
    %35 = vector.load %arg3[%c1, %c0_13] : memref<9x512xf32, #tpu.memory_space<vmem>>, vector<1x512xf32>
    %36 = vector.broadcast %35 : vector<1x512xf32> to vector<4x512xf32>
    %37 = arith.mulf %34, %36 : vector<4x512xf32>
    %c4 = arith.constant 4 : index
    %c0_14 = arith.constant 0 : index
    %38 = vector.load %arg12[%c4, %c0_14] : memref<36x512xf32, #tpu.memory_space<vmem>>, vector<4x512xf32>
    tpu.vector_store %arg12[%c4, %c0_14], %37 {strides = array<i32>} : memref<36x512xf32, #tpu.memory_space<vmem>>, vector<4x512xf32>,
    %c15_i32 = arith.constant 15 : i32
    %39 = tpu.dynamic_rotate %28 by %c15_i32 dim 1 : vector<4x512xf32>, i32 -> vector<4x512xf32>
    %c2 = arith.constant 2 : index
    %c0_15 = arith.constant 0 : index
    %40 = vector.load %arg3[%c2, %c0_15] : memref<9x512xf32, #tpu.memory_space<vmem>>, vector<1x512xf32>
    %41 = vector.broadcast %40 : vector<1x512xf32> to vector<4x512xf32>
    %42 = arith.mulf %39, %41 : vector<4x512xf32>
    %c8 = arith.constant 8 : index
    %c0_16 = arith.constant 0 : index
    %43 = vector.load %arg12[%c8, %c0_16] : memref<36x512xf32, #tpu.memory_space<vmem>>, vector<4x512xf32>
    tpu.vector_store %arg12[%c8, %c0_16], %42 {strides = array<i32>} : memref<36x512xf32, #tpu.memory_space<vmem>>, vector<4x512xf32>,
    %c1_i32_17 = arith.constant 1 : i32
    %44 = tpu.dynamic_rotate %28 by %c1_i32_17 dim 1 : vector<4x512xf32>, i32 -> vector<4x512xf32>
    %c3 = arith.constant 3 : index
    %c0_18 = arith.constant 0 : index
    %45 = vector.load %arg3[%c3, %c0_18] : memref<9x512xf32, #tpu.memory_space<vmem>>, vector<1x512xf32>
    %46 = vector.broadcast %45 : vector<1x512xf32> to vector<4x512xf32>
    %47 = arith.mulf %44, %46 : vector<4x512xf32>
    %c12 = arith.constant 12 : index
    %c0_19 = arith.constant 0 : index
    %48 = vector.load %arg12[%c12, %c0_19] : memref<36x512xf32, #tpu.memory_space<vmem>>, vector<4x512xf32>
    tpu.vector_store %arg12[%c12, %c0_19], %47 {strides = array<i32>} : memref<36x512xf32, #tpu.memory_space<vmem>>, vector<4x512xf32>,
    %c4_20 = arith.constant 4 : index
    %c0_21 = arith.constant 0 : index
    %49 = vector.load %arg3[%c4_20, %c0_21] : memref<9x512xf32, #tpu.memory_space<vmem>>, vector<1x512xf32>
    %50 = vector.broadcast %49 : vector<1x512xf32> to vector<4x512xf32>
    %51 = arith.mulf %28, %50 : vector<4x512xf32>
    %c16 = arith.constant 16 : index
    %c0_22 = arith.constant 0 : index
    %52 = vector.load %arg12[%c16, %c0_22] : memref<36x512xf32, #tpu.memory_space<vmem>>, vector<4x512xf32>
    tpu.vector_store %arg12[%c16, %c0_22], %51 {strides = array<i32>} : memref<36x512xf32, #tpu.memory_space<vmem>>, vector<4x512xf32>,
    %c511_i32 = arith.constant 511 : i32
    %53 = tpu.dynamic_rotate %28 by %c511_i32 dim 1 : vector<4x512xf32>, i32 -> vector<4x512xf32>
    %c5 = arith.constant 5 : index
    %c0_23 = arith.constant 0 : index
    %54 = vector.load %arg3[%c5, %c0_23] : memref<9x512xf32, #tpu.memory_space<vmem>>, vector<1x512xf32>
    %55 = vector.broadcast %54 : vector<1x512xf32> to vector<4x512xf32>
    %56 = arith.mulf %53, %55 : vector<4x512xf32>
    %c20 = arith.constant 20 : index
    %c0_24 = arith.constant 0 : index
    %57 = vector.load %arg12[%c20, %c0_24] : memref<36x512xf32, #tpu.memory_space<vmem>>, vector<4x512xf32>
    tpu.vector_store %arg12[%c20, %c0_24], %56 {strides = array<i32>} : memref<36x512xf32, #tpu.memory_space<vmem>>, vector<4x512xf32>,
    %c497_i32 = arith.constant 497 : i32
    %58 = tpu.dynamic_rotate %28 by %c497_i32 dim 1 : vector<4x512xf32>, i32 -> vector<4x512xf32>
    %c6 = arith.constant 6 : index
    %c0_25 = arith.constant 0 : index
    %59 = vector.load %arg3[%c6, %c0_25] : memref<9x512xf32, #tpu.memory_space<vmem>>, vector<1x512xf32>
    %60 = vector.broadcast %59 : vector<1x512xf32> to vector<4x512xf32>
    %61 = arith.mulf %58, %60 : vector<4x512xf32>
    %c24 = arith.constant 24 : index
    %c0_26 = arith.constant 0 : index
    %62 = vector.load %arg12[%c24, %c0_26] : memref<36x512xf32, #tpu.memory_space<vmem>>, vector<4x512xf32>
    tpu.vector_store %arg12[%c24, %c0_26], %61 {strides = array<i32>} : memref<36x512xf32, #tpu.memory_space<vmem>>, vector<4x512xf32>,
    %c496_i32 = arith.constant 496 : i32
    %63 = tpu.dynamic_rotate %28 by %c496_i32 dim 1 : vector<4x512xf32>, i32 -> vector<4x512xf32>
    %c7 = arith.constant 7 : index
    %c0_27 = arith.constant 0 : index
    %64 = vector.load %arg3[%c7, %c0_27] : memref<9x512xf32, #tpu.memory_space<vmem>>, vector<1x512xf32>
    %65 = vector.broadcast %64 : vector<1x512xf32> to vector<4x512xf32>
    %66 = arith.mulf %63, %65 : vector<4x512xf32>
    %c28 = arith.constant 28 : index
    %c0_28 = arith.constant 0 : index
    %67 = vector.load %arg12[%c28, %c0_28] : memref<36x512xf32, #tpu.memory_space<vmem>>, vector<4x512xf32>
    tpu.vector_store %arg12[%c28, %c0_28], %66 {strides = array<i32>} : memref<36x512xf32, #tpu.memory_space<vmem>>, vector<4x512xf32>,
    %c495_i32 = arith.constant 495 : i32
    %68 = tpu.dynamic_rotate %28 by %c495_i32 dim 1 : vector<4x512xf32>, i32 -> vector<4x512xf32>
    %c8_29 = arith.constant 8 : index
    %c0_30 = arith.constant 0 : index
    %69 = vector.load %arg3[%c8_29, %c0_30] : memref<9x512xf32, #tpu.memory_space<vmem>>, vector<1x512xf32>
    %70 = vector.broadcast %69 : vector<1x512xf32> to vector<4x512xf32>
    %71 = arith.mulf %68, %70 : vector<4x512xf32>
    %c32 = arith.constant 32 : index
    %c0_31 = arith.constant 0 : index
    %72 = vector.load %arg12[%c32, %c0_31] : memref<36x512xf32, #tpu.memory_space<vmem>>, vector<4x512xf32>
    tpu.vector_store %arg12[%c32, %c0_31], %71 {strides = array<i32>} : memref<36x512xf32, #tpu.memory_space<vmem>>, vector<4x512xf32>,
    %c0_32 = arith.constant 0 : index
    %c0_33 = arith.constant 0 : index
    %73 = vector.load %arg6[%c0_32, %c0_33] : memref<4x36xf32, #tpu.memory_space<vmem>>, vector<4x36xf32>
    %c0_34 = arith.constant 0 : index
    %c0_35 = arith.constant 0 : index
    %74 = vector.load %arg12[%c0_34, %c0_35] : memref<36x512xf32, #tpu.memory_space<vmem>>, vector<36x512xf32>
    %cst_36 = arith.constant dense<0.000000e+00> : vector<4x512xf32>
    %75 = tpu.matmul %73, %74, %cst_36 {dimension_numbers = #tpu.dot_dimension_numbers<[1], [0], [0], [1], [0, 0, 1, 1], [], []>} : vector<4x36xf32>, vector<36x512xf32>, vector<4x512xf32> -> vector<4x512xf32>
    %c0_37 = arith.constant 0 : index
    %c0_38 = arith.constant 0 : index
    %76 = vector.load %arg7[%c0_37, %c0_38] : memref<4x1xf32, #tpu.memory_space<vmem>>, vector<4x1xf32>
    %77 = vector.broadcast %76 : vector<4x1xf32> to vector<4x512xf32>
    %78 = arith.addf %75, %77 : vector<4x512xf32>
    %cst_39 = arith.constant 0.000000e+00 : f32
    %79 = vector.broadcast %cst_39 : f32 to vector<4x512xf32>
    %80 = arith.maximumf %78, %79 : vector<4x512xf32>
    %c0_40 = arith.constant 0 : index
    %c0_41 = arith.constant 0 : index
    %81 = vector.load %arg8[%c0_40, %c0_41] : memref<32x4xf32, #tpu.memory_space<vmem>>, vector<32x4xf32>
    %cst_42 = arith.constant dense<0.000000e+00> : vector<32x512xf32>
    %82 = tpu.matmul %81, %80, %cst_42 {dimension_numbers = #tpu.dot_dimension_numbers<[1], [0], [0], [1], [0, 0, 1, 1], [], []>} : vector<32x4xf32>, vector<4x512xf32>, vector<32x512xf32> -> vector<32x512xf32>
    %c0_43 = arith.constant 0 : index
    %c0_44 = arith.constant 0 : index
    %83 = vector.load %arg9[%c0_43, %c0_44] : memref<32x1xf32, #tpu.memory_space<vmem>>, vector<32x1xf32>
    %84 = vector.broadcast %83 : vector<32x1xf32> to vector<32x512xf32>
    %85 = arith.addf %82, %84 : vector<32x512xf32>
    %cst_45 = arith.constant 0.000000e+00 : f32
    %86 = vector.broadcast %cst_45 : f32 to vector<32x512xf32>
    %87 = arith.maximumf %85, %86 : vector<32x512xf32>
    %88 = vector.extract_strided_slice %87 {offsets = [0, 0], sizes = [32, 256], strides = [1, 1]} : vector<32x512xf32> to vector<32x256xf32>
    %89 = vector.extract_strided_slice %16 {offsets = [0, 0], sizes = [16, 256], strides = [1, 1]} : vector<16x512xf32> to vector<16x256xf32>
    %90 = vector.extract_strided_slice %88 {offsets = [0, 0], sizes = [16, 256], strides = [1, 1]} : vector<32x256xf32> to vector<16x256xf32>
    %91 = arith.addf %90, %89 : vector<16x256xf32>
    %cst_46 = arith.constant 0.000000e+00 : f32
    %92 = vector.broadcast %cst_46 : f32 to vector<16x256xf32>
    %93 = arith.maximumf %91, %92 : vector<16x256xf32>
    %c0_47 = arith.constant 0 : index
    %c0_48 = arith.constant 0 : index
    %c0_49 = arith.constant 0 : index
    %c0_50 = arith.constant 0 : index
    %94 = vector.load %arg10[%c0_47, %c0_48, %c0_49, %c0_50] : memref<1x2x32x256xf32, #tpu.memory_space<vmem>>, vector<1x1x16x256xf32>
    %95 = vector.shape_cast %94 : vector<1x1x16x256xf32> to vector<16x256xf32>
    %96 = vector.shape_cast %93 : vector<16x256xf32> to vector<1x1x16x256xf32>
    tpu.vector_store %arg10[%c0_47, %c0_48, %c0_49, %c0_50], %96 {strides = array<i32>} : memref<1x2x32x256xf32, #tpu.memory_space<vmem>>, vector<1x1x16x256xf32>,
    %97 = vector.extract_strided_slice %88 {offsets = [16, 0], sizes = [16, 256], strides = [1, 1]} : vector<32x256xf32> to vector<16x256xf32>
    %cst_51 = arith.constant 0.000000e+00 : f32
    %98 = vector.broadcast %cst_51 : f32 to vector<16x256xf32>
    %99 = arith.maximumf %97, %98 : vector<16x256xf32>
    %c0_52 = arith.constant 0 : index
    %c0_53 = arith.constant 0 : index
    %c16_54 = arith.constant 16 : index
    %c0_55 = arith.constant 0 : index
    %100 = vector.load %arg10[%c0_52, %c0_53, %c16_54, %c0_55] : memref<1x2x32x256xf32, #tpu.memory_space<vmem>>, vector<1x1x16x256xf32>
    %101 = vector.shape_cast %100 : vector<1x1x16x256xf32> to vector<16x256xf32>
    %102 = vector.shape_cast %99 : vector<16x256xf32> to vector<1x1x16x256xf32>
    tpu.vector_store %arg10[%c0_52, %c0_53, %c16_54, %c0_55], %102 {strides = array<i32>} : memref<1x2x32x256xf32, #tpu.memory_space<vmem>>, vector<1x1x16x256xf32>,
    %103 = vector.extract_strided_slice %21 {offsets = [0, 0], sizes = [16, 256], strides = [1, 1]} : vector<16x512xi32> to vector<16x256xi32>
    %c0_56 = arith.constant 0 : index
    %c0_57 = arith.constant 0 : index
    %c0_58 = arith.constant 0 : index
    %c0_59 = arith.constant 0 : index
    %104 = vector.load %arg11[%c0_56, %c0_57, %c0_58, %c0_59] : memref<1x2x16x256xi32, #tpu.memory_space<vmem>>, vector<1x1x16x256xi32>
    %105 = vector.shape_cast %104 : vector<1x1x16x256xi32> to vector<16x256xi32>
    %106 = vector.shape_cast %103 : vector<16x256xi32> to vector<1x1x16x256xi32>
    tpu.vector_store %arg11[%c0_56, %c0_57, %c0_58, %c0_59], %106 {strides = array<i32>} : memref<1x2x16x256xi32, #tpu.memory_space<vmem>>, vector<1x1x16x256xi32>,
    %107 = vector.extract_strided_slice %87 {offsets = [0, 256], sizes = [32, 256], strides = [1, 1]} : vector<32x512xf32> to vector<32x256xf32>
    %108 = vector.extract_strided_slice %16 {offsets = [0, 256], sizes = [16, 256], strides = [1, 1]} : vector<16x512xf32> to vector<16x256xf32>
    %109 = vector.extract_strided_slice %107 {offsets = [0, 0], sizes = [16, 256], strides = [1, 1]} : vector<32x256xf32> to vector<16x256xf32>
    %110 = arith.addf %109, %108 : vector<16x256xf32>
    %cst_60 = arith.constant 0.000000e+00 : f32
    %111 = vector.broadcast %cst_60 : f32 to vector<16x256xf32>
    %112 = arith.maximumf %110, %111 : vector<16x256xf32>
    %c0_61 = arith.constant 0 : index
    %c1_62 = arith.constant 1 : index
    %c0_63 = arith.constant 0 : index
    %c0_64 = arith.constant 0 : index
    %113 = vector.load %arg10[%c0_61, %c1_62, %c0_63, %c0_64] : memref<1x2x32x256xf32, #tpu.memory_space<vmem>>, vector<1x1x16x256xf32>
    %114 = vector.shape_cast %113 : vector<1x1x16x256xf32> to vector<16x256xf32>
    %115 = vector.shape_cast %112 : vector<16x256xf32> to vector<1x1x16x256xf32>
    tpu.vector_store %arg10[%c0_61, %c1_62, %c0_63, %c0_64], %115 {strides = array<i32>} : memref<1x2x32x256xf32, #tpu.memory_space<vmem>>, vector<1x1x16x256xf32>,
    %116 = vector.extract_strided_slice %107 {offsets = [16, 0], sizes = [16, 256], strides = [1, 1]} : vector<32x256xf32> to vector<16x256xf32>
    %cst_65 = arith.constant 0.000000e+00 : f32
    %117 = vector.broadcast %cst_65 : f32 to vector<16x256xf32>
    %118 = arith.maximumf %116, %117 : vector<16x256xf32>
    %c0_66 = arith.constant 0 : index
    %c1_67 = arith.constant 1 : index
    %c16_68 = arith.constant 16 : index
    %c0_69 = arith.constant 0 : index
    %119 = vector.load %arg10[%c0_66, %c1_67, %c16_68, %c0_69] : memref<1x2x32x256xf32, #tpu.memory_space<vmem>>, vector<1x1x16x256xf32>
    %120 = vector.shape_cast %119 : vector<1x1x16x256xf32> to vector<16x256xf32>
    %121 = vector.shape_cast %118 : vector<16x256xf32> to vector<1x1x16x256xf32>
    tpu.vector_store %arg10[%c0_66, %c1_67, %c16_68, %c0_69], %121 {strides = array<i32>} : memref<1x2x32x256xf32, #tpu.memory_space<vmem>>, vector<1x1x16x256xf32>,
    %122 = vector.extract_strided_slice %21 {offsets = [0, 256], sizes = [16, 256], strides = [1, 1]} : vector<16x512xi32> to vector<16x256xi32>
    %c0_70 = arith.constant 0 : index
    %c1_71 = arith.constant 1 : index
    %c0_72 = arith.constant 0 : index
    %c0_73 = arith.constant 0 : index
    %123 = vector.load %arg11[%c0_70, %c1_71, %c0_72, %c0_73] : memref<1x2x16x256xi32, #tpu.memory_space<vmem>>, vector<1x1x16x256xi32>
    %124 = vector.shape_cast %123 : vector<1x1x16x256xi32> to vector<16x256xi32>
    %125 = vector.shape_cast %122 : vector<16x256xi32> to vector<1x1x16x256xi32>
    tpu.vector_store %arg11[%c0_70, %c1_71, %c0_72, %c0_73], %125 {strides = array<i32>} : memref<1x2x16x256xi32, #tpu.memory_space<vmem>>, vector<1x1x16x256xi32>,
    return
  }
  func.func @transform_0(%arg0: i32) -> (i32, i32, i32) {
    %c0_i32 = arith.constant 0 : i32
    %c0_i32_0 = arith.constant 0 : i32
    %c0_i32_1 = arith.constant 0 : i32
    return %arg0, %c0_i32, %c0_i32_0 : i32, i32, i32
  }
  func.func @transform_1(%arg0: i32) -> (i32, i32) {
    %c0_i32 = arith.constant 0 : i32
    %c0_i32_0 = arith.constant 0 : i32
    %c0_i32_1 = arith.constant 0 : i32
    return %c0_i32, %c0_i32_0 : i32, i32
  }
  func.func @transform_2(%arg0: i32) -> (i32, i32) {
    %c0_i32 = arith.constant 0 : i32
    %c0_i32_0 = arith.constant 0 : i32
    %c0_i32_1 = arith.constant 0 : i32
    return %c0_i32, %c0_i32_0 : i32, i32
  }
  func.func @transform_3(%arg0: i32) -> (i32, i32) {
    %c0_i32 = arith.constant 0 : i32
    %c0_i32_0 = arith.constant 0 : i32
    %c0_i32_1 = arith.constant 0 : i32
    return %c0_i32, %c0_i32_0 : i32, i32
  }
  func.func @transform_4(%arg0: i32) -> (i32, i32) {
    %c0_i32 = arith.constant 0 : i32
    %c0_i32_0 = arith.constant 0 : i32
    %c0_i32_1 = arith.constant 0 : i32
    return %c0_i32, %c0_i32_0 : i32, i32
  }
  func.func @transform_5(%arg0: i32) -> (i32, i32) {
    %c0_i32 = arith.constant 0 : i32
    %c0_i32_0 = arith.constant 0 : i32
    %c0_i32_1 = arith.constant 0 : i32
    return %c0_i32, %c0_i32_0 : i32, i32
  }
  func.func @transform_6(%arg0: i32) -> (i32, i32) {
    %c0_i32 = arith.constant 0 : i32
    %c0_i32_0 = arith.constant 0 : i32
    %c0_i32_1 = arith.constant 0 : i32
    return %c0_i32, %c0_i32_0 : i32, i32
  }
  func.func @transform_7(%arg0: i32) -> (i32, i32) {
    %c0_i32 = arith.constant 0 : i32
    %c0_i32_0 = arith.constant 0 : i32
    %c0_i32_1 = arith.constant 0 : i32
    return %c0_i32, %c0_i32_0 : i32, i32
  }
  func.func @transform_8(%arg0: i32) -> (i32, i32) {
    %c0_i32 = arith.constant 0 : i32
    %c0_i32_0 = arith.constant 0 : i32
    %c0_i32_1 = arith.constant 0 : i32
    return %c0_i32, %c0_i32_0 : i32, i32
  }
  func.func @transform_9(%arg0: i32) -> (i32, i32, i32, i32) {
    %c0_i32 = arith.constant 0 : i32
    %c0_i32_0 = arith.constant 0 : i32
    %c0_i32_1 = arith.constant 0 : i32
    %c0_i32_2 = arith.constant 0 : i32
    return %arg0, %c0_i32, %c0_i32_0, %c0_i32_1 : i32, i32, i32, i32
  }
  func.func @transform_10(%arg0: i32) -> (i32, i32, i32, i32) {
    %c0_i32 = arith.constant 0 : i32
    %c0_i32_0 = arith.constant 0 : i32
    %c0_i32_1 = arith.constant 0 : i32
    %c0_i32_2 = arith.constant 0 : i32
    return %arg0, %c0_i32, %c0_i32_0, %c0_i32_1 : i32, i32, i32, i32
  }
}

</mosaic_0001>

<llo_original>
// kernel: downsampling_bottleneck.1
$region0: #{downsampling_bottleneck.1}
  #allocation0 [shape = 'u32[]', space=smem, size = 0x4, offset = 0x4, fixed_abs, tag = 'smem constant byte address 0x4 - core index']
  #allocation1 [shape = 'u32[72,128]{1,0:T(1,128)}', space=vmem, size = 0x9000, scoped, tag = 'internal scratch']
  #allocation2 [shape = 'f32[36,512]{1,0:T(8,128)}', space=vmem, size = 0x14000, scoped, tag = 'scratch operand']
  %s0 = inlined_call_operand.vmem [shape: f32[2,64,512], index: 0, kind: input, shape index: {}]
  %s1 = inlined_call_operand.vmem [shape: s32[1,512], index: 1, kind: input, shape index: {}]
  %s2 = inlined_call_operand.vmem [shape: f32[9,512], index: 2, kind: input, shape index: {}]
  %s3 = inlined_call_operand.vmem [shape: f32[4,64], index: 3, kind: input, shape index: {}]
  %s4 = inlined_call_operand.vmem [shape: f32[4,1], index: 4, kind: input, shape index: {}]
  %s5 = inlined_call_operand.vmem [shape: f32[4,36], index: 5, kind: input, shape index: {}]
  %s6 = inlined_call_operand.vmem [shape: f32[4,1], index: 6, kind: input, shape index: {}]
  %s7 = inlined_call_operand.vmem [shape: f32[32,4], index: 7, kind: input, shape index: {}]
  %s8 = inlined_call_operand.vmem [shape: f32[32,1], index: 8, kind: input, shape index: {}]
  %s9 = inlined_call_operand.vmem [shape: f32[2,2,32,256], index: 9, kind: output, shape index: {0}]
  %s10 = inlined_call_operand.vmem [shape: s32[2,2,16,256], index: 10, kind: output, shape index: {1}]
  %11 = xla_tuple %s9, %s10
  %s12 = sld [smem:[#allocation0]]
  $region77: #{downsampling_bottleneck.1} parent=0
    _
  %s14 = ssub.s32 1, %s12
  %s15 = scalar_select 0, %s14, %s12
  loop: start=0, step=1, limit=4
  $region2: #{downsampling_bottleneck.1} parent=0 // loop_pre_header
    _
  $region3: #{downsampling_bottleneck.1} parent=0 // loop_header
    %s17 = sphi 0, %s21
    %p18 = scmp.ge.s32.totalorder %s17, 4
    %s27 = sphi 0, %s29
    %s30 = sphi 0, %s27
    %s31 = sphi 0, %s30
    %s47 = sphi 0, %s31
    %s51 = sphi 0, %s51
    %s53 = sphi 0, %s51
    %s54 = sphi 0, %s53
    %s68 = sphi 0, %s54
    %s72 = sphi 0, %s72
    %s74 = sphi 0, %s72
    %s75 = sphi 0, %s74
    %s89 = sphi 0, %s75
    %s93 = sphi 0, %s93
    %s95 = sphi 0, %s93
    %s96 = sphi 0, %s95
    %s110 = sphi 0, %s96
    %s114 = sphi 0, %s114
    %s116 = sphi 0, %s114
    %s117 = sphi 0, %s116
    %s131 = sphi 0, %s117
    %s135 = sphi 0, %s135
    %s137 = sphi 0, %s135
    %s138 = sphi 0, %s137
    %s152 = sphi 0, %s138
    %s156 = sphi 0, %s156
    %s158 = sphi 0, %s156
    %s159 = sphi 0, %s158
    %s173 = sphi 0, %s159
    %s177 = sphi 0, %s177
    %s179 = sphi 0, %s177
    %s180 = sphi 0, %s179
    %s194 = sphi 0, %s180
    %s198 = sphi 0, %s198
    %s200 = sphi 0, %s198
    %s201 = sphi 0, %s200
    %s215 = sphi 0, %s201
    %s221 = sphi 0, %s223
    %s224 = sphi 0, %s221
    %s225 = sphi 0, %s224
    %s241 = sphi 0, %s225
    %s247 = sphi 0, %s249
    %s250 = sphi 0, %s247
    %s251 = sphi 0, %s250
    %s267 = sphi 0, %s251
  $region4: #{downsampling_bottleneck.1} parent=0 // loop_header_branch
    %20 = sbr.rel (%p18) target = $region8
  $region5: #{downsampling_bottleneck.1} parent=0 // loop_body
    %s22 = ssub.s32 %s17, 1
    %s23 = ssub.s32 %s17, 2
    %s24 = sadd.s32 %s17, 1
    %s25 = ssub.s32 %s17, %s24
    %p26 = scmp.eq.s32.totalorder %s25, 0
    %s28 = sadd.s32 %s27, 1
    %s29 = scalar_select %p26, %s27, %s28
    %p32 = pneg %p26
    %p33 = scmp.eq.s32.totalorder %s17, 1
    %p34 = por %p32, %p33
    %p35 = scmp.ne.s32.totalorder %s27, %s30
    %p36 = scmp.eq.s32.totalorder %s17, 0
    %p37 = por %p35, %p36
    %p38 = scmp.ne.s32.totalorder %s27, %s30
    %p39 = scmp.eq.s32.totalorder %s22, 1
    %p40 = por %p38, %p39
    %p41 = scmp.ne.s32.totalorder %s30, %s31
    %p42 = scmp.eq.s32.totalorder %s22, 0
    %p43 = por %p41, %p42
    %p44 = scmp.ne.s32.totalorder %s30, %s31
    %p45 = scmp.eq.s32.totalorder %s23, 1
    %p46 = por %p44, %p45
    %p48 = scmp.ne.s32.totalorder %s31, %s47
    %p49 = scmp.eq.s32.totalorder %s23, 0
    %p50 = por %p48, %p49
    %s52 = sadd.s32 %s51, 1
    %p55 = scmp.eq.s32.totalorder %s17, 1
    %p56 = scmp.ne.s32.totalorder %s51, %s53
    %p57 = scmp.eq.s32.totalorder %s17, 0
    %p58 = por %p56, %p57
    %p59 = scmp.ne.s32.totalorder %s51, %s53
    %p60 = scmp.eq.s32.totalorder %s22, 1
    %p61 = por %p59, %p60
    %p62 = scmp.ne.s32.totalorder %s53, %s54
    %p63 = scmp.eq.s32.totalorder %s22, 0
    %p64 = por %p62, %p63
    %p65 = scmp.ne.s32.totalorder %s53, %s54
    %p66 = scmp.eq.s32.totalorder %s23, 1
    %p67 = por %p65, %p66
    %p69 = scmp.ne.s32.totalorder %s54, %s68
    %p70 = scmp.eq.s32.totalorder %s23, 0
    %p71 = por %p69, %p70
    %s73 = sadd.s32 %s72, 1
    %p76 = scmp.eq.s32.totalorder %s17, 1
    %p77 = scmp.ne.s32.totalorder %s72, %s74
    %p78 = scmp.eq.s32.totalorder %s17, 0
    %p79 = por %p77, %p78
    %p80 = scmp.ne.s32.totalorder %s72, %s74
    %p81 = scmp.eq.s32.totalorder %s22, 1
    %p82 = por %p80, %p81
    %p83 = scmp.ne.s32.totalorder %s74, %s75
    %p84 = scmp.eq.s32.totalorder %s22, 0
    %p85 = por %p83, %p84
    %p86 = scmp.ne.s32.totalorder %s74, %s75
    %p87 = scmp.eq.s32.totalorder %s23, 1
    %p88 = por %p86, %p87
    %p90 = scmp.ne.s32.totalorder %s75, %s89
    %p91 = scmp.eq.s32.totalorder %s23, 0
    %p92 = por %p90, %p91
    %s94 = sadd.s32 %s93, 1
    %p97 = scmp.eq.s32.totalorder %s17, 1
    %p98 = scmp.ne.s32.totalorder %s93, %s95
    %p99 = scmp.eq.s32.totalorder %s17, 0
    %p100 = por %p98, %p99
    %p101 = scmp.ne.s32.totalorder %s93, %s95
    %p102 = scmp.eq.s32.totalorder %s22, 1
    %p103 = por %p101, %p102
    %p104 = scmp.ne.s32.totalorder %s95, %s96
    %p105 = scmp.eq.s32.totalorder %s22, 0
    %p106 = por %p104, %p105
    %p107 = scmp.ne.s32.totalorder %s95, %s96
    %p108 = scmp.eq.s32.totalorder %s23, 1
    %p109 = por %p107, %p108
    %p111 = scmp.ne.s32.totalorder %s96, %s110
    %p112 = scmp.eq.s32.totalorder %s23, 0
    %p113 = por %p111, %p112
    %s115 = sadd.s32 %s114, 1
    %p118 = scmp.eq.s32.totalorder %s17, 1
    %p119 = scmp.ne.s32.totalorder %s114, %s116
    %p120 = scmp.eq.s32.totalorder %s17, 0
    %p121 = por %p119, %p120
    %p122 = scmp.ne.s32.totalorder %s114, %s116
    %p123 = scmp.eq.s32.totalorder %s22, 1
    %p124 = por %p122, %p123
    %p125 = scmp.ne.s32.totalorder %s116, %s117
    %p126 = scmp.eq.s32.totalorder %s22, 0
    %p127 = por %p125, %p126
    %p128 = scmp.ne.s32.totalorder %s116, %s117
    %p129 = scmp.eq.s32.totalorder %s23, 1
    %p130 = por %p128, %p129
    %p132 = scmp.ne.s32.totalorder %s117, %s131
    %p133 = scmp.eq.s32.totalorder %s23, 0
    %p134 = por %p132, %p133
    %s136 = sadd.s32 %s135, 1
    %p139 = scmp.eq.s32.totalorder %s17, 1
    %p140 = scmp.ne.s32.totalorder %s135, %s137
    %p141 = scmp.eq.s32.totalorder %s17, 0
    %p142 = por %p140, %p141
    %p143 = scmp.ne.s32.totalorder %s135, %s137
    %p144 = scmp.eq.s32.totalorder %s22, 1
    %p145 = por %p143, %p144
    %p146 = scmp.ne.s32.totalorder %s137, %s138
    %p147 = scmp.eq.s32.totalorder %s22, 0
    %p148 = por %p146, %p147
    %p149 = scmp.ne.s32.totalorder %s137, %s138
    %p150 = scmp.eq.s32.totalorder %s23, 1
    %p151 = por %p149, %p150
    %p153 = scmp.ne.s32.totalorder %s138, %s152
    %p154 = scmp.eq.s32.totalorder %s23, 0
    %p155 = por %p153, %p154
    %s157 = sadd.s32 %s156, 1
    %p160 = scmp.eq.s32.totalorder %s17, 1
    %p161 = scmp.ne.s32.totalorder %s156, %s158
    %p162 = scmp.eq.s32.totalorder %s17, 0
    %p163 = por %p161, %p162
    %p164 = scmp.ne.s32.totalorder %s156, %s158
    %p165 = scmp.eq.s32.totalorder %s22, 1
    %p166 = por %p164, %p165
    %p167 = scmp.ne.s32.totalorder %s158, %s159
    %p168 = scmp.eq.s32.totalorder %s22, 0
    %p169 = por %p167, %p168
    %p170 = scmp.ne.s32.totalorder %s158, %s159
    %p171 = scmp.eq.s32.totalorder %s23, 1
    %p172 = por %p170, %p171
    %p174 = scmp.ne.s32.totalorder %s159, %s173
    %p175 = scmp.eq.s32.totalorder %s23, 0
    %p176 = por %p174, %p175
    %s178 = sadd.s32 %s177, 1
    %p181 = scmp.eq.s32.totalorder %s17, 1
    %p182 = scmp.ne.s32.totalorder %s177, %s179
    %p183 = scmp.eq.s32.totalorder %s17, 0
    %p184 = por %p182, %p183
    %p185 = scmp.ne.s32.totalorder %s177, %s179
    %p186 = scmp.eq.s32.totalorder %s22, 1
    %p187 = por %p185, %p186
    %p188 = scmp.ne.s32.totalorder %s179, %s180
    %p189 = scmp.eq.s32.totalorder %s22, 0
    %p190 = por %p188, %p189
    %p191 = scmp.ne.s32.totalorder %s179, %s180
    %p192 = scmp.eq.s32.totalorder %s23, 1
    %p193 = por %p191, %p192
    %p195 = scmp.ne.s32.totalorder %s180, %s194
    %p196 = scmp.eq.s32.totalorder %s23, 0
    %p197 = por %p195, %p196
    %s199 = sadd.s32 %s198, 1
    %p202 = scmp.eq.s32.totalorder %s17, 1
    %p203 = scmp.ne.s32.totalorder %s198, %s200
    %p204 = scmp.eq.s32.totalorder %s17, 0
    %p205 = por %p203, %p204
    %p206 = scmp.ne.s32.totalorder %s198, %s200
    %p207 = scmp.eq.s32.totalorder %s22, 1
    %p208 = por %p206, %p207
    %p209 = scmp.ne.s32.totalorder %s200, %s201
    %p210 = scmp.eq.s32.totalorder %s22, 0
    %p211 = por %p209, %p210
    %p212 = scmp.ne.s32.totalorder %s200, %s201
    %p213 = scmp.eq.s32.totalorder %s23, 1
    %p214 = por %p212, %p213
    %p216 = scmp.ne.s32.totalorder %s201, %s215
    %p217 = scmp.eq.s32.totalorder %s23, 0
    %p218 = por %p216, %p217
    %s219 = ssub.s32 %s17, %s24
    %p220 = scmp.eq.s32.totalorder %s219, 0
    %s222 = sadd.s32 %s221, 1
    %s223 = scalar_select %p220, %s221, %s222
    %p226 = pneg %p220
    %p227 = scmp.eq.s32.totalorder %s17, 1
    %p228 = por %p226, %p227
    %p229 = scmp.ne.s32.totalorder %s221, %s224
    %p230 = scmp.eq.s32.totalorder %s17, 0
    %p231 = por %p229, %p230
    %p232 = scmp.ne.s32.totalorder %s221, %s224
    %p233 = scmp.eq.s32.totalorder %s22, 1
    %p234 = por %p232, %p233
    %p235 = scmp.ne.s32.totalorder %s224, %s225
    %p236 = scmp.eq.s32.totalorder %s22, 0
    %p237 = por %p235, %p236
    %p238 = scmp.ne.s32.totalorder %s224, %s225
    %p239 = scmp.eq.s32.totalorder %s23, 1
    %p240 = por %p238, %p239
    %p242 = scmp.ne.s32.totalorder %s225, %s241
    %p243 = scmp.eq.s32.totalorder %s23, 0
    %p244 = por %p242, %p243
    %s245 = ssub.s32 %s17, %s24
    %p246 = scmp.eq.s32.totalorder %s245, 0
    %s248 = sadd.s32 %s247, 1
    %s249 = scalar_select %p246, %s247, %s248
    %p252 = pneg %p246
    %p253 = scmp.eq.s32.totalorder %s17, 1
    %p254 = por %p252, %p253
    %p255 = scmp.ne.s32.totalorder %s247, %s250
    %p256 = scmp.eq.s32.totalorder %s17, 0
    %p257 = por %p255, %p256
    %p258 = scmp.ne.s32.totalorder %s247, %s250
    %p259 = scmp.eq.s32.totalorder %s22, 1
    %p260 = por %p258, %p259
    %p261 = scmp.ne.s32.totalorder %s250, %s251
    %p262 = scmp.eq.s32.totalorder %s22, 0
    %p263 = por %p261, %p262
    %p264 = scmp.ne.s32.totalorder %s250, %s251
    %p265 = scmp.eq.s32.totalorder %s23, 1
    %p266 = por %p264, %p265
    %p268 = scmp.ne.s32.totalorder %s251, %s267
    %p269 = scmp.eq.s32.totalorder %s23, 0
    %p270 = por %p268, %p269
    %p271 = scmp.le.s32.totalorder 1, %s17
    %p272 = scmp.lt.s32.totalorder %s17, 3
    %p273 = pnand %p271, %p272
    %p274 = pneg %p273
    // Predicated region
    $region9: #{downsampling_bottleneck.1} parent=5 // pred_check
      _
    $region10: #{downsampling_bottleneck.1} parent=5 // pred_check_branch
      %276 = sbr.rel (%p273) target = $region12
    $region11: #{downsampling_bottleneck.1} parent=5 // pred_region
      %s277 = ssub.s32 %s17, 1
      // Predicated region
      $region13: #{downsampling_bottleneck.1} parent=11 // pred_check
        %p278 = pneg %p64
      $region14: #{downsampling_bottleneck.1} parent=11 // pred_check_branch
        %280 = sbr.rel (%p278) target = $region16
      $region15: #{downsampling_bottleneck.1} parent=11 // pred_region
        _
      $region16: #{downsampling_bottleneck.1} parent=11 // pred_fallthru
        _
      // Predicated region
      $region17: #{downsampling_bottleneck.1} parent=11 // pred_check
        %p281 = pneg %p85
      $region18: #{downsampling_bottleneck.1} parent=11 // pred_check_branch
        %283 = sbr.rel (%p281) target = $region20
      $region19: #{downsampling_bottleneck.1} parent=11 // pred_region
        _
      $region20: #{downsampling_bottleneck.1} parent=11 // pred_fallthru
        _
      // Predicated region
      $region21: #{downsampling_bottleneck.1} parent=11 // pred_check
        %p284 = pneg %p106
      $region22: #{downsampling_bottleneck.1} parent=11 // pred_check_branch
        %286 = sbr.rel (%p284) target = $region24
      $region23: #{downsampling_bottleneck.1} parent=11 // pred_region
        _
      $region24: #{downsampling_bottleneck.1} parent=11 // pred_fallthru
        _
      // Predicated region
      $region25: #{downsampling_bottleneck.1} parent=11 // pred_check
        %p287 = pneg %p127
      $region26: #{downsampling_bottleneck.1} parent=11 // pred_check_branch
        %289 = sbr.rel (%p287) target = $region28
      $region27: #{downsampling_bottleneck.1} parent=11 // pred_region
        _
      $region28: #{downsampling_bottleneck.1} parent=11 // pred_fallthru
        _
      // Predicated region
      $region29: #{downsampling_bottleneck.1} parent=11 // pred_check
        %p290 = pneg %p148
      $region30: #{downsampling_bottleneck.1} parent=11 // pred_check_branch
        %292 = sbr.rel (%p290) target = $region32
      $region31: #{downsampling_bottleneck.1} parent=11 // pred_region
        _
      $region32: #{downsampling_bottleneck.1} parent=11 // pred_fallthru
        _
      // Predicated region
      $region33: #{downsampling_bottleneck.1} parent=11 // pred_check
        %p293 = pneg %p169
      $region34: #{downsampling_bottleneck.1} parent=11 // pred_check_branch
        %295 = sbr.rel (%p293) target = $region36
      $region35: #{downsampling_bottleneck.1} parent=11 // pred_region
        _
      $region36: #{downsampling_bottleneck.1} parent=11 // pred_fallthru
        _
      // Predicated region
      $region37: #{downsampling_bottleneck.1} parent=11 // pred_check
        %p296 = pneg %p190
      $region38: #{downsampling_bottleneck.1} parent=11 // pred_check_branch
        %298 = sbr.rel (%p296) target = $region40
      $region39: #{downsampling_bottleneck.1} parent=11 // pred_region
        _
      $region40: #{downsampling_bottleneck.1} parent=11 // pred_fallthru
        _
      // Predicated region
      $region41: #{downsampling_bottleneck.1} parent=11 // pred_check
        %p299 = pneg %p211
      $region42: #{downsampling_bottleneck.1} parent=11 // pred_check_branch
        %301 = sbr.rel (%p299) target = $region44
      $region43: #{downsampling_bottleneck.1} parent=11 // pred_region
        _
      $region44: #{downsampling_bottleneck.1} parent=11 // pred_fallthru
        _
    $region12: #{downsampling_bottleneck.1} parent=5 // pred_fallthru
      _
    %p302 = scmp.lt.s32.totalorder %s17, 2
    // Predicated region
    $region45: #{downsampling_bottleneck.1} parent=5 // pred_check
      %p303 = pneg %p302
    $region46: #{downsampling_bottleneck.1} parent=5 // pred_check_branch
      %305 = sbr.rel (%p303) target = $region48
    $region47: #{downsampling_bottleneck.1} parent=5 // pred_region
      // Predicated region
      $region49: #{downsampling_bottleneck.1} parent=47 // pred_check
        %p306 = pneg %p37
      $region50: #{downsampling_bottleneck.1} parent=47 // pred_check_branch
        %308 = sbr.rel (%p306) target = $region52
      $region51: #{downsampling_bottleneck.1} parent=47 // pred_region
        %p309 = scmp.lt.s32.totalorder %s17, 1
        %s310 = scalar_select %p309, %s17, 1
        %s311 = smul.addr %s310, 32
        %s312 = smul.addr %s311, 8
        %s313 = scalar_lea.vmem %s0, %s312
      $region52: #{downsampling_bottleneck.1} parent=47 // pred_fallthru
        _
    $region48: #{downsampling_bottleneck.1} parent=5 // pred_fallthru
      _
    %p314 = scmp.le.s32.totalorder 1, %s17
    %p315 = scmp.lt.s32.totalorder %s17, 3
    %p316 = pnand %p314, %p315
    %p317 = pneg %p316
    // Predicated region
    $region53: #{downsampling_bottleneck.1} parent=5 // pred_check
      _
    $region54: #{downsampling_bottleneck.1} parent=5 // pred_check_branch
      %319 = sbr.rel (%p316) target = $region56
    $region55: #{downsampling_bottleneck.1} parent=5 // pred_region
      %s320 = ssub.s32 %s17, 1
      %p321 = scmp.lt.s32.totalorder %s22, 1
      %s322 = scalar_select %p321, %s22, 1
      %s323 = smul.addr %s322, 32
      %s324 = smul.addr %s323, 8
      %s325 = scalar_lea.vmem %s0, %s324
      %p326 = pneg %p43
      %p327 = pneg %p40
      %p328 = pneg %p64
      %p329 = pneg %p61
      %p330 = pneg %p85
      %p331 = pneg %p82
      %p332 = pneg %p106
      %p333 = pneg %p103
      %p334 = pneg %p127
      %p335 = pneg %p124
      %p336 = pneg %p148
      %p337 = pneg %p145
      %p338 = pneg %p169
      %p339 = pneg %p166
      %p340 = pneg %p190
      %p341 = pneg %p187
      %p342 = pneg %p211
      %p343 = pneg %p208
      %p344 = pneg %p237
      %p345 = pneg %p234
      %p346 = scmp.lt.s32.totalorder %s22, 1
      %s347 = scalar_select %p346, %s22, 1
      %s348 = smul.addr %s347, 16
      %s349 = smul.addr %s348, 8
      %s350 = scalar_lea.vmem %s9, %s349
      %p351 = pneg %p263
      %p352 = pneg %p260
      %p353 = scmp.lt.s32.totalorder %s22, 1
      %s354 = scalar_select %p353, %s22, 1
      %s355 = smul.addr %s354, 8
      %s356 = smul.addr %s355, 8
      %s357 = scalar_lea.vmem %s10, %s356
      %p358 = scmp.lt.s32.totalorder %s22, 1
      %s359 = scalar_select %p358, %s22, 1
      %s360 = smul.addr %s359, 32
      %s361 = smul.addr %s360, 8
      %s362 = scalar_lea.vmem %s0, %s361
      %p363 = scmp.lt.s32.totalorder %s22, 1
      %s364 = scalar_select %p363, %s22, 1
      %s365 = smul.addr %s364, 16
      %s366 = smul.addr %s365, 8
      %s367 = scalar_lea.vmem %s9, %s366
      %p368 = scmp.lt.s32.totalorder %s22, 1
      %s369 = scalar_select %p368, %s22, 1
      %s370 = smul.addr %s369, 8
      %s371 = smul.addr %s370, 8
      %s372 = scalar_lea.vmem %s10, %s371
      %v373 = vld [vmem:[%s362] sm:$0xff]
      %v374 = vld [vmem:[%s362 + $0x8] sm:$0xff]
      %v375 = vld [vmem:[%s362 + $0x10] sm:$0xff]
      %v376 = vld [vmem:[%s362 + $0x18] sm:$0xff]
      %v377 = vld [vmem:[%s362 + $0x20] sm:$0xff]
      %v378 = vld [vmem:[%s362 + $0x28] sm:$0xff]
      %v379 = vld [vmem:[%s362 + $0x30] sm:$0xff]
      %v380 = vld [vmem:[%s362 + $0x38] sm:$0xff]
      %v381 = vld [vmem:[%s362 + $0x40] sm:$0xff]
      %v382 = vld [vmem:[%s362 + $0x48] sm:$0xff]
      %v383 = vld [vmem:[%s362 + $0x50] sm:$0xff]
      %v384 = vld [vmem:[%s362 + $0x58] sm:$0xff]
      %v385 = vld [vmem:[%s362 + $0x60] sm:$0xff]
      %v386 = vld [vmem:[%s362 + $0x68] sm:$0xff]
      %v387 = vld [vmem:[%s362 + $0x70] sm:$0xff]
      %v388 = vld [vmem:[%s362 + $0x78] sm:$0xff]
      %v389 = vld [vmem:[%s362 + $0x80] sm:$0xff]
      %v390 = vld [vmem:[%s362 + $0x88] sm:$0xff]
      %v391 = vld [vmem:[%s362 + $0x90] sm:$0xff]
      %v392 = vld [vmem:[%s362 + $0x98] sm:$0xff]
      %v393 = vld [vmem:[%s362 + $0xa0] sm:$0xff]
      %v394 = vld [vmem:[%s362 + $0xa8] sm:$0xff]
      %v395 = vld [vmem:[%s362 + $0xb0] sm:$0xff]
      %v396 = vld [vmem:[%s362 + $0xb8] sm:$0xff]
      %v397 = vld [vmem:[%s362 + $0xc0] sm:$0xff]
      %v398 = vld [vmem:[%s362 + $0xc8] sm:$0xff]
      %v399 = vld [vmem:[%s362 + $0xd0] sm:$0xff]
      %v400 = vld [vmem:[%s362 + $0xd8] sm:$0xff]
      %v401 = vld [vmem:[%s362 + $0xe0] sm:$0xff]
      %v402 = vld [vmem:[%s362 + $0xe8] sm:$0xff]
      %v403 = vld [vmem:[%s362 + $0xf0] sm:$0xff]
      %v404 = vld [vmem:[%s362 + $0xf8] sm:$0xff]
      %vm405 = vcmp.gt.f32.partialorder %v381, %v373
      %vm406 = vcmp.gt.f32.partialorder %v382, %v374
      %vm407 = vcmp.gt.f32.partialorder %v383, %v375
      %vm408 = vcmp.gt.f32.partialorder %v384, %v376
      %vm409 = vcmp.gt.f32.partialorder %v385, %v377
      %vm410 = vcmp.gt.f32.partialorder %v386, %v378
      %vm411 = vcmp.gt.f32.partialorder %v387, %v379
      %vm412 = vcmp.gt.f32.partialorder %v388, %v380
      %v413 = vsel %vm405, %v381, %v373
      %v414 = vsel %vm406, %v382, %v374
      %v415 = vsel %vm407, %v383, %v375
      %v416 = vsel %vm408, %v384, %v376
      %v417 = vsel %vm409, %v385, %v377
      %v418 = vsel %vm410, %v386, %v378
      %v419 = vsel %vm411, %v387, %v379
      %v420 = vsel %vm412, %v388, %v380
      %v421 = vsel %vm405, 1, 0
      %v422 = vsel %vm406, 1, 0
      %v423 = vsel %vm407, 1, 0
      %v424 = vsel %vm408, 1, 0
      %v425 = vsel %vm409, 1, 0
      %v426 = vsel %vm410, 1, 0
      %v427 = vsel %vm411, 1, 0
      %v428 = vsel %vm412, 1, 0
      %vm429 = vcmp.gt.f32.partialorder %v389, %v413
      %vm430 = vcmp.gt.f32.partialorder %v390, %v414
      %vm431 = vcmp.gt.f32.partialorder %v391, %v415
      %vm432 = vcmp.gt.f32.partialorder %v392, %v416
      %vm433 = vcmp.gt.f32.partialorder %v393, %v417
      %vm434 = vcmp.gt.f32.partialorder %v394, %v418
      %vm435 = vcmp.gt.f32.partialorder %v395, %v419
      %vm436 = vcmp.gt.f32.partialorder %v396, %v420
      %v437 = vsel %vm429, %v389, %v413
      %v438 = vsel %vm430, %v390, %v414
      %v439 = vsel %vm431, %v391, %v415
      %v440 = vsel %vm432, %v392, %v416
      %v441 = vsel %vm433, %v393, %v417
      %v442 = vsel %vm434, %v394, %v418
      %v443 = vsel %vm435, %v395, %v419
      %v444 = vsel %vm436, %v396, %v420
      %v445 = vsel %vm429, 32, %v421
      %v446 = vsel %vm430, 32, %v422
      %v447 = vsel %vm431, 32, %v423
      %v448 = vsel %vm432, 32, %v424
      %v449 = vsel %vm433, 32, %v425
      %v450 = vsel %vm434, 32, %v426
      %v451 = vsel %vm435, 32, %v427
      %v452 = vsel %vm436, 32, %v428
      %vm453 = vcmp.gt.f32.partialorder %v397, %v437
      %vm454 = vcmp.gt.f32.partialorder %v398, %v438
      %vm455 = vcmp.gt.f32.partialorder %v399, %v439
      %vm456 = vcmp.gt.f32.partialorder %v400, %v440
      %vm457 = vcmp.gt.f32.partialorder %v401, %v441
      %vm458 = vcmp.gt.f32.partialorder %v402, %v442
      %vm459 = vcmp.gt.f32.partialorder %v403, %v443
      %vm460 = vcmp.gt.f32.partialorder %v404, %v444
      %v461 = vsel %vm453, %v397, %v437
      %v462 = vsel %vm454, %v398, %v438
      %v463 = vsel %vm455, %v399, %v439
      %v464 = vsel %vm456, %v400, %v440
      %v465 = vsel %vm457, %v401, %v441
      %v466 = vsel %vm458, %v402, %v442
      %v467 = vsel %vm459, %v403, %v443
      %v468 = vsel %vm460, %v404, %v444
      %v469 = vsel %vm453, 33, %v445
      %v470 = vsel %vm454, 33, %v446
      %v471 = vsel %vm455, 33, %v447
      %v472 = vsel %vm456, 33, %v448
      %v473 = vsel %vm457, 33, %v449
      %v474 = vsel %vm458, 33, %v450
      %v475 = vsel %vm459, 33, %v451
      %v476 = vsel %vm460, 33, %v452
      %v477 = vld [vmem:[%s1] sm:$0xf]
      %v478 = vperm.slane %v477, 0
      %v479 = vperm.slane %v477, 1
      %v480 = vperm.slane %v477, 2
      %v481 = vperm.slane %v477, 3
      %v482 = vadd.s32 %v478, %v469
      %v483 = vadd.s32 %v479, %v470
      %v484 = vadd.s32 %v480, %v471
      %v485 = vadd.s32 %v481, %v472
      %v486 = vadd.s32 %v478, %v473
      %v487 = vadd.s32 %v479, %v474
      %v488 = vadd.s32 %v480, %v475
      %v489 = vadd.s32 %v481, %v476
      %v490 = vld [vmem:[%s3] sm:$0xf]
      %v491 = vld [vmem:[%s4] sm:$0xf]
      %493 = vset.pattern.permute.xlu0 0
      %494 = vperm.xlu0 %493, %v491
      %v495 = vpop.permute.xlu0 %494
      %vm497 = vcmask 523264
      %v499 = vsel %vm497, %v490, 0
      %501 = vmatpush.msra.mxu0 0.0
      %502 = vmatpush.msra.mxu0 0.0
      %503 = vmatpush.msra.mxu0 0.0
      %504 = vmatpush.msra.mxu0 0.0
      %505 = vmatpush.msra.mxu0 0.0
      %506 = vmatpush.msra.mxu0 0.0
      %507 = vmatpush.msra.mxu0 0.0
      %508 = vmatpush.msra.mxu0 0.0
      %509 = vmatpush.msra.mxu0 %v401
      %510 = vmatpush.msra.mxu0 %v397
      %511 = vmatpush.msra.mxu0 %v393
      %512 = vmatpush.msra.mxu0 %v389
      %513 = vmatpush.msra.mxu0 %v385
      %514 = vmatpush.msra.mxu0 %v381
      %515 = vmatpush.msra.mxu0 %v377
      %516 = vmatpush.msra.mxu0 %v373
      %517 = vmatmul.f32.gmra.mxu0 %v499
      %v518 = vpop.f32.mrf.mxu0
      %v519 = vadd.f32 %v495, %v518
      %520 = vdwg.mxu0
      %521 = vmatpush.msra.mxu0 0.0
      %522 = vmatpush.msra.mxu0 0.0
      %523 = vmatpush.msra.mxu0 0.0
      %524 = vmatpush.msra.mxu0 0.0
      %525 = vmatpush.msra.mxu0 0.0
      %526 = vmatpush.msra.mxu0 0.0
      %527 = vmatpush.msra.mxu0 0.0
      %528 = vmatpush.msra.mxu0 0.0
      %529 = vmatpush.msra.mxu0 %v402
      %530 = vmatpush.msra.mxu0 %v398
      %531 = vmatpush.msra.mxu0 %v394
      %532 = vmatpush.msra.mxu0 %v390
      %533 = vmatpush.msra.mxu0 %v386
      %534 = vmatpush.msra.mxu0 %v382
      %535 = vmatpush.msra.mxu0 %v378
      %536 = vmatpush.msra.mxu0 %v374
      %537 = vmatmul.f32.gmra.mxu0 %v499
      %v538 = vpop.f32.mrf.mxu0
      %v539 = vadd.f32 %v495, %v538
      %540 = vdwg.mxu0
      %541 = vmatpush.msra.mxu0 0.0
      %542 = vmatpush.msra.mxu0 0.0
      %543 = vmatpush.msra.mxu0 0.0
      %544 = vmatpush.msra.mxu0 0.0
      %545 = vmatpush.msra.mxu0 0.0
      %546 = vmatpush.msra.mxu0 0.0
      %547 = vmatpush.msra.mxu0 0.0
      %548 = vmatpush.msra.mxu0 0.0
      %549 = vmatpush.msra.mxu0 %v403
      %550 = vmatpush.msra.mxu0 %v399
      %551 = vmatpush.msra.mxu0 %v395
      %552 = vmatpush.msra.mxu0 %v391
      %553 = vmatpush.msra.mxu0 %v387
      %554 = vmatpush.msra.mxu0 %v383
      %555 = vmatpush.msra.mxu0 %v379
      %556 = vmatpush.msra.mxu0 %v375
      %557 = vmatmul.f32.gmra.mxu0 %v499
      %v558 = vpop.f32.mrf.mxu0
      %v559 = vadd.f32 %v495, %v558
      %560 = vdwg.mxu0
      %561 = vmatpush.msra.mxu0 0.0
      %562 = vmatpush.msra.mxu0 0.0
      %563 = vmatpush.msra.mxu0 0.0
      %564 = vmatpush.msra.mxu0 0.0
      %565 = vmatpush.msra.mxu0 0.0
      %566 = vmatpush.msra.mxu0 0.0
      %567 = vmatpush.msra.mxu0 0.0
      %568 = vmatpush.msra.mxu0 0.0
      %569 = vmatpush.msra.mxu0 %v404
      %570 = vmatpush.msra.mxu0 %v400
      %571 = vmatpush.msra.mxu0 %v396
      %572 = vmatpush.msra.mxu0 %v392
      %573 = vmatpush.msra.mxu0 %v388
      %574 = vmatpush.msra.mxu0 %v384
      %575 = vmatpush.msra.mxu0 %v380
      %576 = vmatpush.msra.mxu0 %v376
      %577 = vmatmul.f32.gmra.mxu0 %v499
      %v578 = vpop.f32.mrf.mxu0
      %v579 = vadd.f32 %v495, %v578
      %580 = vdwg.mxu0
      %v581 = vmax.f32 %v519, 0.0
      %v582 = vmax.f32 %v539, 0.0
      %v583 = vmax.f32 %v559, 0.0
      %v584 = vmax.f32 %v579, 0.0
      %585 = vrot.lane.b32.xlu0 %v581, 17
      %v586 = vpop.permute.xlu0 %585
      %587 = vrot.lane.b32.xlu0 %v582, 17
      %v588 = vpop.permute.xlu0 %587
      %589 = vrot.lane.b32.xlu0 %v583, 17
      %v590 = vpop.permute.xlu0 %589
      %591 = vrot.lane.b32.xlu0 %v584, 17
      %v592 = vpop.permute.xlu0 %591
      %v593 = vlaneseq
      %v594 = vand.u32 %v593, 127
      %vm595 = vcmp.lt.s32.totalorder %v594, 17
      %v596 = vsel %vm595, %v590, %v592
      %v597 = vsel %vm595, %v588, %v590
      %v598 = vsel %vm595, %v586, %v588
      %v599 = vsel %vm595, %v592, %v586
      %v600 = vld [vmem:[%s2] ss:$8 sm:$0xf]
      %v602 = vperm.slane %v600, 0
      %v603 = vperm.slane %v600, 1
      %v604 = vperm.slane %v600, 2
      %v605 = vperm.slane %v600, 3
      %v610 = vmul.f32 %v599, %v602
      %v611 = vmul.f32 %v598, %v603
      %v612 = vmul.f32 %v597, %v604
      %v613 = vmul.f32 %v596, %v605
      %614 = vst [vmem:[#allocation2] sm:$0xf] %v610
      %615 = vst [vmem:[#allocation2 + $0x8] sm:$0xf] %v611
      %616 = vst [vmem:[#allocation2 + $0x10] sm:$0xf] %v612
      %617 = vst [vmem:[#allocation2 + $0x18] sm:$0xf] %v613
      %618 = vrot.lane.b32.xlu0 %v581, 16
      %v619 = vpop.permute.xlu0 %618
      %620 = vrot.lane.b32.xlu0 %v582, 16
      %v621 = vpop.permute.xlu0 %620
      %622 = vrot.lane.b32.xlu0 %v583, 16
      %v623 = vpop.permute.xlu0 %622
      %624 = vrot.lane.b32.xlu0 %v584, 16
      %v625 = vpop.permute.xlu0 %624
      %vm626 = vcmp.lt.s32.totalorder %v594, 16
      %v627 = vsel %vm626, %v623, %v625
      %v628 = vsel %vm626, %v621, %v623
      %v629 = vsel %vm626, %v619, %v621
      %v630 = vsel %vm626, %v625, %v619
      %s631 = scalar_lea.vmem %s2, 1
      %v632 = vld [vmem:[%s631] ss:$8 sm:$0xf]
      %v634 = vperm.slane %v632, 0
      %v635 = vperm.slane %v632, 1
      %v636 = vperm.slane %v632, 2
      %v637 = vperm.slane %v632, 3
      %v642 = vmul.f32 %v630, %v634
      %v643 = vmul.f32 %v629, %v635
      %v644 = vmul.f32 %v628, %v636
      %v645 = vmul.f32 %v627, %v637
      %v650 = vrot.slane %v642, 4
      %v651 = vrot.slane %v643, 4
      %v652 = vrot.slane %v644, 4
      %v653 = vrot.slane %v645, 4
      %658 = vst [vmem:[#allocation2] sm:$0xf0] %v650
      %659 = vst [vmem:[#allocation2 + $0x8] sm:$0xf0] %v651
      %660 = vst [vmem:[#allocation2 + $0x10] sm:$0xf0] %v652
      %661 = vst [vmem:[#allocation2 + $0x18] sm:$0xf0] %v653
      %662 = vrot.lane.b32.xlu0 %v581, 15
      %v663 = vpop.permute.xlu0 %662
      %664 = vrot.lane.b32.xlu0 %v582, 15
      %v665 = vpop.permute.xlu0 %664
      %666 = vrot.lane.b32.xlu0 %v583, 15
      %v667 = vpop.permute.xlu0 %666
      %668 = vrot.lane.b32.xlu0 %v584, 15
      %v669 = vpop.permute.xlu0 %668
      %vm670 = vcmp.lt.s32.totalorder %v594, 15
      %v671 = vsel %vm670, %v667, %v669
      %v672 = vsel %vm670, %v665, %v667
      %v673 = vsel %vm670, %v663, %v665
      %v674 = vsel %vm670, %v669, %v663
      %s675 = scalar_lea.vmem %s2, 2
      %v676 = vld [vmem:[%s675] ss:$8 sm:$0xf]
      %v678 = vperm.slane %v676, 0
      %v679 = vperm.slane %v676, 1
      %v680 = vperm.slane %v676, 2
      %v681 = vperm.slane %v676, 3
      %v686 = vmul.f32 %v674, %v678
      %v687 = vmul.f32 %v673, %v679
      %v688 = vmul.f32 %v672, %v680
      %v689 = vmul.f32 %v671, %v681
      %690 = vst [vmem:[#allocation2 + $0x20] sm:$0xf] %v686
      %691 = vst [vmem:[#allocation2 + $0x28] sm:$0xf] %v687
      %692 = vst [vmem:[#allocation2 + $0x30] sm:$0xf] %v688
      %693 = vst [vmem:[#allocation2 + $0x38] sm:$0xf] %v689
      %694 = vrot.lane.b32.xlu0 %v581, 1
      %v695 = vpop.permute.xlu0 %694
      %696 = vrot.lane.b32.xlu0 %v582, 1
      %v697 = vpop.permute.xlu0 %696
      %698 = vrot.lane.b32.xlu0 %v583, 1
      %v699 = vpop.permute.xlu0 %698
      %700 = vrot.lane.b32.xlu0 %v584, 1
      %v701 = vpop.permute.xlu0 %700
      %vm702 = vcmp.lt.s32.totalorder %v594, 1
      %v703 = vsel %vm702, %v699, %v701
      %v704 = vsel %vm702, %v697, %v699
      %v705 = vsel %vm702, %v695, %v697
      %v706 = vsel %vm702, %v701, %v695
      %s707 = scalar_lea.vmem %s2, 3
      %v708 = vld [vmem:[%s707] ss:$8 sm:$0xf]
      %v710 = vperm.slane %v708, 0
      %v711 = vperm.slane %v708, 1
      %v712 = vperm.slane %v708, 2
      %v713 = vperm.slane %v708, 3
      %v718 = vmul.f32 %v706, %v710
      %v719 = vmul.f32 %v705, %v711
      %v720 = vmul.f32 %v704, %v712
      %v721 = vmul.f32 %v703, %v713
      %v726 = vrot.slane %v718, 4
      %v727 = vrot.slane %v719, 4
      %v728 = vrot.slane %v720, 4
      %v729 = vrot.slane %v721, 4
      %734 = vst [vmem:[#allocation2 + $0x20] sm:$0xf0] %v726
      %735 = vst [vmem:[#allocation2 + $0x28] sm:$0xf0] %v727
      %736 = vst [vmem:[#allocation2 + $0x30] sm:$0xf0] %v728
      %737 = vst [vmem:[#allocation2 + $0x38] sm:$0xf0] %v729
      %s738 = scalar_lea.vmem %s2, 4
      %v739 = vld [vmem:[%s738] ss:$8 sm:$0xf]
      %v741 = vperm.slane %v739, 0
      %v742 = vperm.slane %v739, 1
      %v743 = vperm.slane %v739, 2
      %v744 = vperm.slane %v739, 3
      %v749 = vmul.f32 %v581, %v741
      %v750 = vmul.f32 %v582, %v742
      %v751 = vmul.f32 %v583, %v743
      %v752 = vmul.f32 %v584, %v744
      %753 = vst [vmem:[#allocation2 + $0x40] sm:$0xf] %v749
      %754 = vst [vmem:[#allocation2 + $0x48] sm:$0xf] %v750
      %755 = vst [vmem:[#allocation2 + $0x50] sm:$0xf] %v751
      %756 = vst [vmem:[#allocation2 + $0x58] sm:$0xf] %v752
      %757 = vrot.lane.b32.xlu0 %v581, 127
      %v758 = vpop.permute.xlu0 %757
      %759 = vrot.lane.b32.xlu0 %v582, 127
      %v760 = vpop.permute.xlu0 %759
      %761 = vrot.lane.b32.xlu0 %v583, 127
      %v762 = vpop.permute.xlu0 %761
      %763 = vrot.lane.b32.xlu0 %v584, 127
      %v764 = vpop.permute.xlu0 %763
      %vm765 = vcmp.lt.s32.totalorder %v594, 127
      %v766 = vsel %vm765, %v762, %v764
      %v767 = vsel %vm765, %v760, %v762
      %v768 = vsel %vm765, %v758, %v760
      %v769 = vsel %vm765, %v764, %v758
      %s770 = scalar_lea.vmem %s2, 5
      %v771 = vld [vmem:[%s770] ss:$8 sm:$0xf]
      %v773 = vperm.slane %v771, 0
      %v774 = vperm.slane %v771, 1
      %v775 = vperm.slane %v771, 2
      %v776 = vperm.slane %v771, 3
      %v781 = vmul.f32 %v768, %v773
      %v782 = vmul.f32 %v767, %v774
      %v783 = vmul.f32 %v766, %v775
      %v784 = vmul.f32 %v769, %v776
      %v789 = vrot.slane %v781, 4
      %v790 = vrot.slane %v782, 4
      %v791 = vrot.slane %v783, 4
      %v792 = vrot.slane %v784, 4
      %797 = vst [vmem:[#allocation2 + $0x40] sm:$0xf0] %v789
      %798 = vst [vmem:[#allocation2 + $0x48] sm:$0xf0] %v790
      %799 = vst [vmem:[#allocation2 + $0x50] sm:$0xf0] %v791
      %800 = vst [vmem:[#allocation2 + $0x58] sm:$0xf0] %v792
      %801 = vrot.lane.b32.xlu0 %v581, 113
      %v802 = vpop.permute.xlu0 %801
      %803 = vrot.lane.b32.xlu0 %v582, 113
      %v804 = vpop.permute.xlu0 %803
      %805 = vrot.lane.b32.xlu0 %v583, 113
      %v806 = vpop.permute.xlu0 %805
      %807 = vrot.lane.b32.xlu0 %v584, 113
      %v808 = vpop.permute.xlu0 %807
      %vm809 = vcmp.lt.s32.totalorder %v594, 113
      %v810 = vsel %vm809, %v806, %v808
      %v811 = vsel %vm809, %v804, %v806
      %v812 = vsel %vm809, %v802, %v804
      %v813 = vsel %vm809, %v808, %v802
      %s814 = scalar_lea.vmem %s2, 6
      %v815 = vld [vmem:[%s814] ss:$8 sm:$0xf]
      %v817 = vperm.slane %v815, 0
      %v818 = vperm.slane %v815, 1
      %v819 = vperm.slane %v815, 2
      %v820 = vperm.slane %v815, 3
      %v825 = vmul.f32 %v812, %v817
      %v826 = vmul.f32 %v811, %v818
      %v827 = vmul.f32 %v810, %v819
      %v828 = vmul.f32 %v813, %v820
      %829 = vst [vmem:[#allocation2 + $0x60] sm:$0xf] %v825
      %830 = vst [vmem:[#allocation2 + $0x68] sm:$0xf] %v826
      %831 = vst [vmem:[#allocation2 + $0x70] sm:$0xf] %v827
      %832 = vst [vmem:[#allocation2 + $0x78] sm:$0xf] %v828
      %833 = vrot.lane.b32.xlu0 %v581, 112
      %v834 = vpop.permute.xlu0 %833
      %835 = vrot.lane.b32.xlu0 %v582, 112
      %v836 = vpop.permute.xlu0 %835
      %837 = vrot.lane.b32.xlu0 %v583, 112
      %v838 = vpop.permute.xlu0 %837
      %839 = vrot.lane.b32.xlu0 %v584, 112
      %v840 = vpop.permute.xlu0 %839
      %vm841 = vcmp.lt.s32.totalorder %v594, 112
      %v842 = vsel %vm841, %v838, %v840
      %v843 = vsel %vm841, %v836, %v838
      %v844 = vsel %vm841, %v834, %v836
      %v845 = vsel %vm841, %v840, %v834
      %s846 = scalar_lea.vmem %s2, 7
      %v847 = vld [vmem:[%s846] ss:$8 sm:$0xf]
      %v849 = vperm.slane %v847, 0
      %v850 = vperm.slane %v847, 1
      %v851 = vperm.slane %v847, 2
      %v852 = vperm.slane %v847, 3
      %v857 = vmul.f32 %v844, %v849
      %v858 = vmul.f32 %v843, %v850
      %v859 = vmul.f32 %v842, %v851
      %v860 = vmul.f32 %v845, %v852
      %v865 = vrot.slane %v857, 4
      %v866 = vrot.slane %v858, 4
      %v867 = vrot.slane %v859, 4
      %v868 = vrot.slane %v860, 4
      %873 = vst [vmem:[#allocation2 + $0x60] sm:$0xf0] %v865
      %874 = vst [vmem:[#allocation2 + $0x68] sm:$0xf0] %v866
      %875 = vst [vmem:[#allocation2 + $0x70] sm:$0xf0] %v867
      %876 = vst [vmem:[#allocation2 + $0x78] sm:$0xf0] %v868
      %877 = vrot.lane.b32.xlu0 %v581, 111
      %v878 = vpop.permute.xlu0 %877
      %879 = vrot.lane.b32.xlu0 %v582, 111
      %v880 = vpop.permute.xlu0 %879
      %881 = vrot.lane.b32.xlu0 %v583, 111
      %v882 = vpop.permute.xlu0 %881
      %883 = vrot.lane.b32.xlu0 %v584, 111
      %v884 = vpop.permute.xlu0 %883
      %vm885 = vcmp.lt.s32.totalorder %v594, 111
      %v886 = vsel %vm885, %v882, %v884
      %v887 = vsel %vm885, %v880, %v882
      %v888 = vsel %vm885, %v878, %v880
      %v889 = vsel %vm885, %v884, %v878
      %s890 = scalar_lea.vmem %s2, 32
      %v891 = vld [vmem:[%s890] ss:$8 sm:$0xf]
      %v893 = vperm.slane %v891, 0
      %v894 = vperm.slane %v891, 1
      %v895 = vperm.slane %v891, 2
      %v896 = vperm.slane %v891, 3
      %v901 = vmul.f32 %v888, %v893
      %v902 = vmul.f32 %v887, %v894
      %v903 = vmul.f32 %v886, %v895
      %v904 = vmul.f32 %v889, %v896
      %905 = vst [vmem:[#allocation2 + $0x80] sm:$0xf] %v901
      %906 = vst [vmem:[#allocation2 + $0x88] sm:$0xf] %v902
      %907 = vst [vmem:[#allocation2 + $0x90] sm:$0xf] %v903
      %908 = vst [vmem:[#allocation2 + $0x98] sm:$0xf] %v904
      %v909 = vld [vmem:[%s5] sm:$0xf]
      %v910 = vld [vmem:[#allocation2] sm:$0xff]
      %v911 = vld [vmem:[#allocation2 + $0x8] sm:$0xff]
      %v912 = vld [vmem:[#allocation2 + $0x10] sm:$0xff]
      %v913 = vld [vmem:[#allocation2 + $0x18] sm:$0xff]
      %v914 = vld [vmem:[#allocation2 + $0x20] sm:$0xff]
      %v915 = vld [vmem:[#allocation2 + $0x28] sm:$0xff]
      %v916 = vld [vmem:[#allocation2 + $0x30] sm:$0xff]
      %v917 = vld [vmem:[#allocation2 + $0x38] sm:$0xff]
      %v918 = vld [vmem:[#allocation2 + $0x40] sm:$0xff]
      %v919 = vld [vmem:[#allocation2 + $0x48] sm:$0xff]
      %v920 = vld [vmem:[#allocation2 + $0x50] sm:$0xff]
      %v921 = vld [vmem:[#allocation2 + $0x58] sm:$0xff]
      %v922 = vld [vmem:[#allocation2 + $0x60] sm:$0xff]
      %v923 = vld [vmem:[#allocation2 + $0x68] sm:$0xff]
      %v924 = vld [vmem:[#allocation2 + $0x70] sm:$0xff]
      %v925 = vld [vmem:[#allocation2 + $0x78] sm:$0xff]
      %v926 = vld [vmem:[#allocation2 + $0x80] sm:$0xf]
      %v927 = vld [vmem:[#allocation2 + $0x88] sm:$0xf]
      %v928 = vld [vmem:[#allocation2 + $0x90] sm:$0xf]
      %v929 = vld [vmem:[#allocation2 + $0x98] sm:$0xf]
      %v930 = vld [vmem:[%s6] sm:$0xf]
      %932 = vset.pattern.permute.xlu0 0
      %933 = vperm.xlu0 %932, %v930
      %v934 = vpop.permute.xlu0 %933
      %vm936 = vcmask 293888
      %v938 = vsel %vm936, %v909, 0
      %vm940 = vcmask 1043456
      %v942 = vsel %vm940, %v926, 0
      %v945 = vsel %vm940, %v927, 0
      %v948 = vsel %vm940, %v928, 0
      %v951 = vsel %vm940, %v929, 0
      %953 = vmatpush.msra.mxu0 0.0
      %954 = vmatpush.msra.mxu0 0.0
      %955 = vmatpush.msra.mxu0 0.0
      %956 = vmatpush.msra.mxu0 0.0
      %957 = vmatpush.msra.mxu0 0.0
      %958 = vmatpush.msra.mxu0 0.0
      %959 = vmatpush.msra.mxu0 0.0
      %960 = vmatpush.msra.mxu0 0.0
      %961 = vmatpush.msra.mxu0 0.0
      %962 = vmatpush.msra.mxu0 0.0
      %963 = vmatpush.msra.mxu0 0.0
      %964 = vmatpush.msra.mxu0 %v942
      %965 = vmatpush.msra.mxu0 %v922
      %966 = vmatpush.msra.mxu0 %v918
      %967 = vmatpush.msra.mxu0 %v914
      %968 = vmatpush.msra.mxu0 %v910
      %969 = vmatmul.f32.gmra.mxu0 %v938
      %v970 = vpop.f32.mrf.mxu0
      %v971 = vadd.f32 %v934, %v970
      %972 = vdwg.mxu0
      %973 = vmatpush.msra.mxu0 0.0
      %974 = vmatpush.msra.mxu0 0.0
      %975 = vmatpush.msra.mxu0 0.0
      %976 = vmatpush.msra.mxu0 0.0
      %977 = vmatpush.msra.mxu0 0.0
      %978 = vmatpush.msra.mxu0 0.0
      %979 = vmatpush.msra.mxu0 0.0
      %980 = vmatpush.msra.mxu0 0.0
      %981 = vmatpush.msra.mxu0 0.0
      %982 = vmatpush.msra.mxu0 0.0
      %983 = vmatpush.msra.mxu0 0.0
      %984 = vmatpush.msra.mxu0 %v945
      %985 = vmatpush.msra.mxu0 %v923
      %986 = vmatpush.msra.mxu0 %v919
      %987 = vmatpush.msra.mxu0 %v915
      %988 = vmatpush.msra.mxu0 %v911
      %989 = vmatmul.f32.gmra.mxu0 %v938
      %v990 = vpop.f32.mrf.mxu0
      %v991 = vadd.f32 %v934, %v990
      %992 = vdwg.mxu0
      %993 = vmatpush.msra.mxu0 0.0
      %994 = vmatpush.msra.mxu0 0.0
      %995 = vmatpush.msra.mxu0 0.0
      %996 = vmatpush.msra.mxu0 0.0
      %997 = vmatpush.msra.mxu0 0.0
      %998 = vmatpush.msra.mxu0 0.0
      %999 = vmatpush.msra.mxu0 0.0
      %1000 = vmatpush.msra.mxu0 0.0
      %1001 = vmatpush.msra.mxu0 0.0
      %1002 = vmatpush.msra.mxu0 0.0
      %1003 = vmatpush.msra.mxu0 0.0
      %1004 = vmatpush.msra.mxu0 %v948
      %1005 = vmatpush.msra.mxu0 %v924
      %1006 = vmatpush.msra.mxu0 %v920
      %1007 = vmatpush.msra.mxu0 %v916
      %1008 = vmatpush.msra.mxu0 %v912
      %1009 = vmatmul.f32.gmra.mxu0 %v938
      %v1010 = vpop.f32.mrf.mxu0
      %v1011 = vadd.f32 %v934, %v1010
      %1012 = vdwg.mxu0
      %1013 = vmatpush.msra.mxu0 0.0
      %1014 = vmatpush.msra.mxu0 0.0
      %1015 = vmatpush.msra.mxu0 0.0
      %1016 = vmatpush.msra.mxu0 0.0
      %1017 = vmatpush.msra.mxu0 0.0
      %1018 = vmatpush.msra.mxu0 0.0
      %1019 = vmatpush.msra.mxu0 0.0
      %1020 = vmatpush.msra.mxu0 0.0
      %1021 = vmatpush.msra.mxu0 0.0
      %1022 = vmatpush.msra.mxu0 0.0
      %1023 = vmatpush.msra.mxu0 0.0
      %1024 = vmatpush.msra.mxu0 %v951
      %1025 = vmatpush.msra.mxu0 %v925
      %1026 = vmatpush.msra.mxu0 %v921
      %1027 = vmatpush.msra.mxu0 %v917
      %1028 = vmatpush.msra.mxu0 %v913
      %1029 = vmatmul.f32.gmra.mxu0 %v938
      %v1030 = vpop.f32.mrf.mxu0
      %v1031 = vadd.f32 %v934, %v1030
      %1032 = vdwg.mxu0
      %v1033 = vmax.f32 %v971, 0.0
      %v1034 = vmax.f32 %v991, 0.0
      %v1035 = vmax.f32 %v1011, 0.0
      %v1036 = vmax.f32 %v1031, 0.0
      %v1037 = vld [vmem:[%s7] sm:$0xff]
      %v1038 = vld [vmem:[%s7 + $0x8] sm:$0xff]
      %v1039 = vld [vmem:[%s7 + $0x10] sm:$0xff]
      %v1040 = vld [vmem:[%s7 + $0x18] sm:$0xff]
      %v1041 = vld [vmem:[%s8] sm:$0xff]
      %v1042 = vld [vmem:[%s8 + $0x8] sm:$0xff]
      %v1043 = vld [vmem:[%s8 + $0x10] sm:$0xff]
      %v1044 = vld [vmem:[%s8 + $0x18] sm:$0xff]
      %1046 = vset.pattern.permute.xlu0 0
      %1047 = vperm.xlu0 %1046, %v1041
      %v1048 = vpop.permute.xlu0 %1047
      %1051 = vset.pattern.permute.xlu0 0
      %1052 = vperm.xlu0 %1051, %v1042
      %v1053 = vpop.permute.xlu0 %1052
      %1056 = vset.pattern.permute.xlu0 0
      %1057 = vperm.xlu0 %1056, %v1043
      %v1058 = vpop.permute.xlu0 %1057
      %1061 = vset.pattern.permute.xlu0 0
      %1062 = vperm.xlu0 %1061, %v1044
      %v1063 = vpop.permute.xlu0 %1062
      %vm1065 = vcmask 31744
      %v1067 = vsel %vm1065, %v1037, 0
      %v1070 = vsel %vm1065, %v1038, 0
      %v1073 = vsel %vm1065, %v1039, 0
      %v1076 = vsel %vm1065, %v1040, 0
      %v1079 = vsel %vm940, %v1033, 0
      %v1082 = vsel %vm940, %v1034, 0
      %v1085 = vsel %vm940, %v1035, 0
      %v1088 = vsel %vm940, %v1036, 0
      %1090 = vmatpush.msra.mxu0 0.0
      %1091 = vmatpush.msra.mxu0 0.0
      %1092 = vmatpush.msra.mxu0 0.0
      %1093 = vmatpush.msra.mxu0 0.0
      %1094 = vmatpush.msra.mxu0 0.0
      %1095 = vmatpush.msra.mxu0 0.0
      %1096 = vmatpush.msra.mxu0 0.0
      %1097 = vmatpush.msra.mxu0 0.0
      %1098 = vmatpush.msra.mxu0 0.0
      %1099 = vmatpush.msra.mxu0 0.0
      %1100 = vmatpush.msra.mxu0 0.0
      %1101 = vmatpush.msra.mxu0 0.0
      %1102 = vmatpush.msra.mxu0 0.0
      %1103 = vmatpush.msra.mxu0 0.0
      %1104 = vmatpush.msra.mxu0 0.0
      %1105 = vmatpush.msra.mxu0 %v1079
      %1106 = vmatmul.f32.gmra.mxu0 %v1067
      %v1107 = vpop.f32.mrf.mxu0
      %v1108 = vadd.f32 %v1048, %v1107
      %1109 = vmatmul.f32.gmra.mxu0 %v1070
      %v1110 = vpop.f32.mrf.mxu0
      %v1111 = vadd.f32 %v1053, %v1110
      %1112 = vmatmul.f32.gmra.mxu0 %v1073
      %v1113 = vpop.f32.mrf.mxu0
      %v1114 = vadd.f32 %v1058, %v1113
      %1115 = vmatmul.f32.gmra.mxu0 %v1076
      %v1116 = vpop.f32.mrf.mxu0
      %v1117 = vadd.f32 %v1063, %v1116
      %1118 = vdwg.mxu0
      %1119 = vmatpush.msra.mxu0 0.0
      %1120 = vmatpush.msra.mxu0 0.0
      %1121 = vmatpush.msra.mxu0 0.0
      %1122 = vmatpush.msra.mxu0 0.0
      %1123 = vmatpush.msra.mxu0 0.0
      %1124 = vmatpush.msra.mxu0 0.0
      %1125 = vmatpush.msra.mxu0 0.0
      %1126 = vmatpush.msra.mxu0 0.0
      %1127 = vmatpush.msra.mxu0 0.0
      %1128 = vmatpush.msra.mxu0 0.0
      %1129 = vmatpush.msra.mxu0 0.0
      %1130 = vmatpush.msra.mxu0 0.0
      %1131 = vmatpush.msra.mxu0 0.0
      %1132 = vmatpush.msra.mxu0 0.0
      %1133 = vmatpush.msra.mxu0 0.0
      %1134 = vmatpush.msra.mxu0 %v1082
      %1135 = vmatmul.f32.gmra.mxu0 %v1067
      %v1136 = vpop.f32.mrf.mxu0
      %v1137 = vadd.f32 %v1048, %v1136
      %1138 = vmatmul.f32.gmra.mxu0 %v1070
      %v1139 = vpop.f32.mrf.mxu0
      %v1140 = vadd.f32 %v1053, %v1139
      %1141 = vmatmul.f32.gmra.mxu0 %v1073
      %v1142 = vpop.f32.mrf.mxu0
      %v1143 = vadd.f32 %v1058, %v1142
      %1144 = vmatmul.f32.gmra.mxu0 %v1076
      %v1145 = vpop.f32.mrf.mxu0
      %v1146 = vadd.f32 %v1063, %v1145
      %1147 = vdwg.mxu0
      %1148 = vmatpush.msra.mxu0 0.0
      %1149 = vmatpush.msra.mxu0 0.0
      %1150 = vmatpush.msra.mxu0 0.0
      %1151 = vmatpush.msra.mxu0 0.0
      %1152 = vmatpush.msra.mxu0 0.0
      %1153 = vmatpush.msra.mxu0 0.0
      %1154 = vmatpush.msra.mxu0 0.0
      %1155 = vmatpush.msra.mxu0 0.0
      %1156 = vmatpush.msra.mxu0 0.0
      %1157 = vmatpush.msra.mxu0 0.0
      %1158 = vmatpush.msra.mxu0 0.0
      %1159 = vmatpush.msra.mxu0 0.0
      %1160 = vmatpush.msra.mxu0 0.0
      %1161 = vmatpush.msra.mxu0 0.0
      %1162 = vmatpush.msra.mxu0 0.0
      %1163 = vmatpush.msra.mxu0 %v1085
      %1164 = vmatmul.f32.gmra.mxu0 %v1067
      %v1165 = vpop.f32.mrf.mxu0
      %v1166 = vadd.f32 %v1048, %v1165
      %1167 = vmatmul.f32.gmra.mxu0 %v1070
      %v1168 = vpop.f32.mrf.mxu0
      %v1169 = vadd.f32 %v1053, %v1168
      %1170 = vmatmul.f32.gmra.mxu0 %v1073
      %v1171 = vpop.f32.mrf.mxu0
      %v1172 = vadd.f32 %v1058, %v1171
      %1173 = vmatmul.f32.gmra.mxu0 %v1076
      %v1174 = vpop.f32.mrf.mxu0
      %v1175 = vadd.f32 %v1063, %v1174
      %1176 = vdwg.mxu0
      %1177 = vmatpush.msra.mxu0 0.0
      %1178 = vmatpush.msra.mxu0 0.0
      %1179 = vmatpush.msra.mxu0 0.0
      %1180 = vmatpush.msra.mxu0 0.0
      %1181 = vmatpush.msra.mxu0 0.0
      %1182 = vmatpush.msra.mxu0 0.0
      %1183 = vmatpush.msra.mxu0 0.0
      %1184 = vmatpush.msra.mxu0 0.0
      %1185 = vmatpush.msra.mxu0 0.0
      %1186 = vmatpush.msra.mxu0 0.0
      %1187 = vmatpush.msra.mxu0 0.0
      %1188 = vmatpush.msra.mxu0 0.0
      %1189 = vmatpush.msra.mxu0 0.0
      %1190 = vmatpush.msra.mxu0 0.0
      %1191 = vmatpush.msra.mxu0 0.0
      %1192 = vmatpush.msra.mxu0 %v1088
      %1193 = vmatmul.f32.gmra.mxu0 %v1067
      %v1194 = vpop.f32.mrf.mxu0
      %v1195 = vadd.f32 %v1048, %v1194
      %1196 = vmatmul.f32.gmra.mxu0 %v1070
      %v1197 = vpop.f32.mrf.mxu0
      %v1198 = vadd.f32 %v1053, %v1197
      %1199 = vmatmul.f32.gmra.mxu0 %v1073
      %v1200 = vpop.f32.mrf.mxu0
      %v1201 = vadd.f32 %v1058, %v1200
      %1202 = vmatmul.f32.gmra.mxu0 %v1076
      %v1203 = vpop.f32.mrf.mxu0
      %v1204 = vadd.f32 %v1063, %v1203
      %1205 = vdwg.mxu0
      %v1206 = vmax.f32 %v1108, 0.0
      %v1207 = vmax.f32 %v1137, 0.0
      %v1208 = vmax.f32 %v1166, 0.0
      %v1209 = vmax.f32 %v1195, 0.0
      %v1210 = vmax.f32 %v1111, 0.0
      %v1211 = vmax.f32 %v1140, 0.0
      %v1212 = vmax.f32 %v1169, 0.0
      %v1213 = vmax.f32 %v1198, 0.0
      %v1214 = vmax.f32 %v1114, 0.0
      %v1215 = vmax.f32 %v1143, 0.0
      %v1216 = vmax.f32 %v1172, 0.0
      %v1217 = vmax.f32 %v1201, 0.0
      %v1218 = vmax.f32 %v1117, 0.0
      %v1219 = vmax.f32 %v1146, 0.0
      %v1220 = vmax.f32 %v1175, 0.0
      %v1221 = vmax.f32 %v1204, 0.0
      %v1222 = vadd.f32 %v1206, %v461
      %v1223 = vadd.f32 %v1207, %v462
      %v1224 = vadd.f32 %v1210, %v465
      %v1225 = vadd.f32 %v1211, %v466
      %v1226 = vmax.f32 %v1222, 0.0
      %v1227 = vmax.f32 %v1223, 0.0
      %v1228 = vmax.f32 %v1224, 0.0
      %v1229 = vmax.f32 %v1225, 0.0
      %1230 = vst [vmem:[%s367] sm:$0xff] %v1226
      %1231 = vst [vmem:[%s367 + $0x8] sm:$0xff] %v1227
      %1232 = vst [vmem:[%s367 + $0x10] sm:$0xff] %v1228
      %1233 = vst [vmem:[%s367 + $0x18] sm:$0xff] %v1229
      %v1234 = vmax.f32 %v1214, 0.0
      %v1235 = vmax.f32 %v1215, 0.0
      %v1236 = vmax.f32 %v1218, 0.0
      %v1237 = vmax.f32 %v1219, 0.0
      %1238 = vst [vmem:[%s367 + $0x20] sm:$0xff] %v1234
      %1239 = vst [vmem:[%s367 + $0x28] sm:$0xff] %v1235
      %1240 = vst [vmem:[%s367 + $0x30] sm:$0xff] %v1236
      %1241 = vst [vmem:[%s367 + $0x38] sm:$0xff] %v1237
      %1242 = vst [vmem:[%s372] sm:$0xff] %v482
      %1243 = vst [vmem:[%s372 + $0x8] sm:$0xff] %v483
      %1244 = vst [vmem:[%s372 + $0x10] sm:$0xff] %v486
      %1245 = vst [vmem:[%s372 + $0x18] sm:$0xff] %v487
      %v1246 = vadd.f32 %v1208, %v463
      %v1247 = vadd.f32 %v1209, %v464
      %v1248 = vadd.f32 %v1212, %v467
      %v1249 = vadd.f32 %v1213, %v468
      %v1250 = vmax.f32 %v1246, 0.0
      %v1251 = vmax.f32 %v1247, 0.0
      %v1252 = vmax.f32 %v1248, 0.0
      %v1253 = vmax.f32 %v1249, 0.0
      %s1254 = scalar_lea.vmem %s367, 64
      %1255 = vst [vmem:[%s1254] sm:$0xff] %v1250
      %1256 = vst [vmem:[%s1254 + $0x8] sm:$0xff] %v1251
      %1257 = vst [vmem:[%s1254 + $0x10] sm:$0xff] %v1252
      %1258 = vst [vmem:[%s1254 + $0x18] sm:$0xff] %v1253
      %v1259 = vmax.f32 %v1216, 0.0
      %v1260 = vmax.f32 %v1217, 0.0
      %v1261 = vmax.f32 %v1220, 0.0
      %v1262 = vmax.f32 %v1221, 0.0
      %1263 = vst [vmem:[%s1254 + $0x20] sm:$0xff] %v1259
      %1264 = vst [vmem:[%s1254 + $0x28] sm:$0xff] %v1260
      %1265 = vst [vmem:[%s1254 + $0x30] sm:$0xff] %v1261
      %1266 = vst [vmem:[%s1254 + $0x38] sm:$0xff] %v1262
      %s1267 = scalar_lea.vmem %s372, 32
      %1268 = vst [vmem:[%s1267] sm:$0xff] %v484
      %1269 = vst [vmem:[%s1267 + $0x8] sm:$0xff] %v485
      %1270 = vst [vmem:[%s1267 + $0x10] sm:$0xff] %v488
      %1271 = vst [vmem:[%s1267 + $0x18] sm:$0xff] %v489
      %p1272 = scmp.lt.s32.totalorder %s22, 1
      %s1273 = scalar_select %p1272, %s22, 1
      %s1274 = smul.addr %s1273, 16
      %s1275 = smul.addr %s1274, 8
      %s1276 = scalar_lea.vmem %s9, %s1275
      %p1277 = scmp.lt.s32.totalorder %s22, 1
      %s1278 = scalar_select %p1277, %s22, 1
      %s1279 = smul.addr %s1278, 8
      %s1280 = smul.addr %s1279, 8
      %s1281 = scalar_lea.vmem %s10, %s1280
      // Predicated region
      $region57: #{downsampling_bottleneck.1} parent=55 // pred_check
        %p1282 = pneg %p234
      $region58: #{downsampling_bottleneck.1} parent=55 // pred_check_branch
        %1284 = sbr.rel (%p1282) target = $region60
      $region59: #{downsampling_bottleneck.1} parent=55 // pred_region
        _
      $region60: #{downsampling_bottleneck.1} parent=55 // pred_fallthru
        _
      // Predicated region
      $region61: #{downsampling_bottleneck.1} parent=55 // pred_check
        %p1285 = pneg %p260
      $region62: #{downsampling_bottleneck.1} parent=55 // pred_check_branch
        %1287 = sbr.rel (%p1285) target = $region64
      $region63: #{downsampling_bottleneck.1} parent=55 // pred_region
        _
      $region64: #{downsampling_bottleneck.1} parent=55 // pred_fallthru
        _
    $region56: #{downsampling_bottleneck.1} parent=5 // pred_fallthru
      _
    %p1288 = scmp.le.s32.totalorder 2, %s17
    // Predicated region
    $region65: #{downsampling_bottleneck.1} parent=5 // pred_check
      %p1289 = pneg %p1288
    $region66: #{downsampling_bottleneck.1} parent=5 // pred_check_branch
      %1291 = sbr.rel (%p1289) target = $region68
    $region67: #{downsampling_bottleneck.1} parent=5 // pred_region
      %s1292 = ssub.s32 %s17, 2
      // Predicated region
      $region69: #{downsampling_bottleneck.1} parent=67 // pred_check
        %p1293 = pneg %p240
      $region70: #{downsampling_bottleneck.1} parent=67 // pred_check_branch
        %1295 = sbr.rel (%p1293) target = $region72
      $region71: #{downsampling_bottleneck.1} parent=67 // pred_region
        %p1296 = scmp.lt.s32.totalorder %s23, 1
        %s1297 = scalar_select %p1296, %s23, 1
        %s1298 = smul.addr %s1297, 16
        %s1299 = smul.addr %s1298, 8
        %s1300 = scalar_lea.vmem %s9, %s1299
      $region72: #{downsampling_bottleneck.1} parent=67 // pred_fallthru
        _
      // Predicated region
      $region73: #{downsampling_bottleneck.1} parent=67 // pred_check
        %p1301 = pneg %p266
      $region74: #{downsampling_bottleneck.1} parent=67 // pred_check_branch
        %1303 = sbr.rel (%p1301) target = $region76
      $region75: #{downsampling_bottleneck.1} parent=67 // pred_region
        %p1304 = scmp.lt.s32.totalorder %s23, 1
        %s1305 = scalar_select %p1304, %s23, 1
        %s1306 = smul.addr %s1305, 8
        %s1307 = smul.addr %s1306, 8
        %s1308 = scalar_lea.vmem %s10, %s1307
      $region76: #{downsampling_bottleneck.1} parent=67 // pred_fallthru
        _
    $region68: #{downsampling_bottleneck.1} parent=5 // pred_fallthru
      _
  $region6: #{downsampling_bottleneck.1} parent=0 // loop_footer
    %s21 = sadd.s32 1, %s17
  $region7: #{downsampling_bottleneck.1} parent=0 // loop_footer_branch
    %16 = sbr.rel target = $region3
  $region8: #{downsampling_bottleneck.1} parent=0 // loop_exit
    _

</llo_original>
